<compile_context>
chip_gen: v7x
topology: tpu7x:2x2x1
jax: 0.10.0
libtpu: 0.0.40
codegen_flags: <defaults>
</compile_context>

<pallas_src>
import math
import functools

import jax
import jax.numpy as jnp
from jax.experimental import pallas as pl
from jax.experimental.pallas import tpu as pltpu


# ----------------------------------------------------------------------------
# helpers
# ----------------------------------------------------------------------------
def _pick_tile(dim, cap, align):
    """Largest divisor of `dim` that is <= cap and a multiple of `align`.
    Falls back to the full dim (always layout-legal) if none exists."""
    if dim <= cap:
        return dim
    start = cap - (cap % align)
    for t in range(start, align - 1, -align):
        if dim % t == 0:
            return t
    return dim


def _query_vmem_limit():
    """3/4 of physical VMEM (re-derived per chip: v5e/v6e 128MiB, v7x 64MiB).
    Falls back to the compiler default (None) if the query is unavailable."""
    try:
        return int(pltpu.get_tpu_info().vmem_capacity_bytes * 3 // 4)
    except Exception:
        return None


_VMEM_LIMIT = _query_vmem_limit()


def _mosaic_params(dims):
    kw = dict(dimension_semantics=dims)
    if _VMEM_LIMIT is not None:
        kw["vmem_limit_bytes"] = _VMEM_LIMIT
    return pltpu.CompilerParams(**kw)


# ----------------------------------------------------------------------------
# Tiled linear:  y = x @ W_t + b   (x:[M,Din] bf16, W_t:[Din,Dout] bf16, b:[Dout] f32)
# ----------------------------------------------------------------------------
def _linear_kernel(x_ref, w_ref, b_ref, o_ref, acc_ref):
    @pl.when(pl.program_id(2) == 0)
    def _():
        acc_ref[...] = jnp.zeros_like(acc_ref)

    acc_ref[...] += jnp.dot(x_ref[...], w_ref[...],
                            preferred_element_type=jnp.float32)

    @pl.when(pl.program_id(2) == pl.num_programs(2) - 1)
    def _():
        o_ref[...] = (acc_ref[...] + b_ref[...]).astype(o_ref.dtype)


def pallas_linear(x2d, w_t, b, out_dtype=None,
                  block_m=512, block_n=256, block_k=512):
    M, Din = x2d.shape
    Dout = w_t.shape[1]
    out_dtype = x2d.dtype if out_dtype is None else out_dtype

    tm = _pick_tile(M, block_m, 16)       # 16-aligned -> full bf16 sublane packing
    tn = _pick_tile(Dout, block_n, 128)
    tk = _pick_tile(Din, block_k, 128)
    b2d = b.reshape(1, Dout).astype(jnp.float32)

    return pl.pallas_call(
        _linear_kernel,
        out_shape=jax.ShapeDtypeStruct((M, Dout), out_dtype),
        grid=(M // tm, Dout // tn, Din // tk),
        in_specs=[
            pl.BlockSpec((tm, tk), lambda i, j, k: (i, k)),
            pl.BlockSpec((tk, tn), lambda i, j, k: (k, j)),
            pl.BlockSpec((1, tn), lambda i, j, k: (0, j)),
        ],
        out_specs=pl.BlockSpec((tm, tn), lambda i, j, k: (i, j)),
        scratch_shapes=[pltpu.VMEM((tm, tn), jnp.float32)],
        compiler_params=_mosaic_params(("parallel", "parallel", "arbitrary")),
    )(x2d, w_t, b2d)


# ----------------------------------------------------------------------------
# Flash-style attention.  All heads packed per grid step, online softmax over kv
# tiles.  Q is pre-scaled (scale folded into the projection weights), mask comes
# in as an additive bf16 bias (or is absent).  Outputs:
#   * context, lane-dense [B, Lq, H*dh]
#   * head-0 log-sum-exp  [B, Lq, 1]   (consumed by the top_attn side kernel)
# ----------------------------------------------------------------------------
def _flash_attn_kernel(*refs, has_bias):
    if has_bias:
        q_ref, k_ref, v_ref, bias_ref, ctx_ref, lse_ref, m_sc, l_sc, acc_sc = refs
    else:
        q_ref, k_ref, v_ref, ctx_ref, lse_ref, m_sc, l_sc, acc_sc = refs
        bias_ref = None

    H, tq, dh = acc_sc.shape
    ki = pl.program_id(1)

    @pl.when(ki == 0)
    def _():
        m_sc[...] = jnp.full_like(m_sc, -jnp.inf)
        l_sc[...] = jnp.zeros_like(l_sc)
        acc_sc[...] = jnp.zeros_like(acc_sc)

    q = q_ref[0]                      # [H, tq, dh]  bf16 (already scaled by 1/sqrt(dh))
    k = k_ref[0]                      # [H, tk, dh]
    v = v_ref[0]                      # [H, tk, dh]

    s = jnp.einsum('hqd,hkd->hqk', q, k,
                   preferred_element_type=jnp.float32)            # [H, tq, tk] f32
    if has_bias:
        s = s + bias_ref[0][None].astype(jnp.float32)              # single add per score

    m_prev = m_sc[...]                                             # [H, tq, 1]
    m_new = jnp.maximum(m_prev, jnp.max(s, axis=-1, keepdims=True))
    alpha = jnp.exp(m_prev - m_new)                                # [H, tq, 1]
    p = jnp.exp(s - m_new)                                         # [H, tq, tk]

    l_sc[...] = alpha * l_sc[...] + jnp.sum(p, axis=-1, keepdims=True)
    pv = jnp.einsum('hqk,hkd->hqd', p.astype(v.dtype), v,
                    preferred_element_type=jnp.float32)            # [H, tq, dh]
    acc_sc[...] = alpha * acc_sc[...] + pv
    m_sc[...] = m_new

    @pl.when(ki == pl.num_programs(1) - 1)
    def _():
        inv_l = pl.reciprocal(l_sc[...], approx=True)              # EUP slot
        ctx = acc_sc[...] * inv_l                                  # [H, tq, dh] f32
        # combine heads in VMEM -> lane-dense [tq, H*dh] single store (finalize only)
        ctx = jnp.concatenate([ctx[h] for h in range(H)], axis=-1)
        ctx_ref[0] = ctx.astype(ctx_ref.dtype)
        # head-0 log-sum-exp for the (exact) top_attn side kernel
        lse_ref[0] = m_sc[0] + jnp.log(l_sc[0])


def pallas_flash_attention(q_up, k_up, v_up, bias, *,
                           block_q=256, block_kv=1024,
                           score_vmem_budget_bytes=24 << 20):
    """q_up [B,H,Lq,dh], k_up/v_up [B,H,Lk,dh], bias [B,Lq,Lk] bf16 additive (or None).
    Returns (context [B,Lq,H*dh], lse_head0 [B,Lq,1])."""
    B, H, Lq, dh = q_up.shape
    Lk = k_up.shape[2]

    tq = _pick_tile(Lq, block_q, 16)
    # Cap the kv tile so the two in-kernel f32 [H,tq,tk] temporaries (scores, probs)
    # stay within budget -> safe on v7x (64 MiB physical VMEM) for large H.
    max_tk = max(128, score_vmem_budget_bytes // (2 * 4 * H * tq))
    tk = _pick_tile(Lk, min(block_kv, max_tk), 128)
    nq, nk = Lq // tq, Lk // tk
    has_bias = bias is not None

    kernel = functools.partial(_flash_attn_kernel, has_bias=has_bias)

    # B and q-tiles flattened into one parallel axis (balanced across v7x's 2 TCs).
    in_specs = [
        pl.BlockSpec((1, H, tq, dh), lambda i, ki: (i // nq, 0, i % nq, 0)),
        pl.BlockSpec((1, H, tk, dh), lambda i, ki: (i // nq, 0, ki, 0)),
        pl.BlockSpec((1, H, tk, dh), lambda i, ki: (i // nq, 0, ki, 0)),
    ]
    inputs = [q_up, k_up, v_up]
    if has_bias:
        in_specs.append(pl.BlockSpec((1, tq, tk), lambda i, ki: (i // nq, i % nq, ki)))
        inputs.append(bias)

    out_shape = (jax.ShapeDtypeStruct((B, Lq, H * dh), q_up.dtype),
                 jax.ShapeDtypeStruct((B, Lq, 1), jnp.float32))
    out_specs = (pl.BlockSpec((1, tq, H * dh), lambda i, ki: (i // nq, i % nq, 0)),
                 pl.BlockSpec((1, tq, 1), lambda i, ki: (i // nq, i % nq, 0)))

    ctx, lse0 = pl.pallas_call(
        kernel,
        out_shape=out_shape,
        grid=(B * nq, nk),
        in_specs=in_specs,
        out_specs=out_specs,
        scratch_shapes=[
            pltpu.VMEM((H, tq, 1), jnp.float32),    # running max
            pltpu.VMEM((H, tq, 1), jnp.float32),    # running denom
            pltpu.VMEM((H, tq, dh), jnp.float32),   # running ctx accumulator
        ],
        compiler_params=_mosaic_params(("parallel", "arbitrary")),
    )(*inputs)
    return ctx, lse0


# ----------------------------------------------------------------------------
# top_attn side kernel (head 0 only): p = exp(s + bias - lse).  kv-tiled, exact
# normalization (no approx reciprocal), bounded VMEM for long Lk.
# ----------------------------------------------------------------------------
def _head0_probs_kernel(*refs, has_bias):
    if has_bias:
        q_ref, k_ref, lse_ref, bias_ref, attn_ref = refs
    else:
        q_ref, k_ref, lse_ref, attn_ref = refs
        bias_ref = None

    q = q_ref[0, 0]                    # [tq, dh]   (pre-scaled)
    k = k_ref[0, 0]                    # [tk, dh]
    s = jnp.einsum('qd,kd->qk', q, k, preferred_element_type=jnp.float32)
    if has_bias:
        s = s + bias_ref[0].astype(jnp.float32)
    p = jnp.exp(s - lse_ref[0])        # lse [tq,1] broadcasts; exact softmax probs
    attn_ref[0] = p.astype(attn_ref.dtype)


def pallas_head0_attention(q_up, k_up, lse0, bias, *,
                           block_q=256, block_kv=1024, out_dtype=jnp.float32):
    B, H, Lq, dh = q_up.shape
    Lk = k_up.shape[2]
    tq = _pick_tile(Lq, block_q, 16)
    tk = _pick_tile(Lk, block_kv, 128)
    nq, nk = Lq // tq, Lk // tk
    has_bias = bias is not None

    kernel = functools.partial(_head0_probs_kernel, has_bias=has_bias)
    in_specs = [
        pl.BlockSpec((1, 1, tq, dh), lambda i, ki: (i // nq, 0, i % nq, 0)),
        pl.BlockSpec((1, 1, tk, dh), lambda i, ki: (i // nq, 0, ki, 0)),
        pl.BlockSpec((1, tq, 1), lambda i, ki: (i // nq, i % nq, 0)),
    ]
    inputs = [q_up, k_up, lse0]
    if has_bias:
        in_specs.append(pl.BlockSpec((1, tq, tk), lambda i, ki: (i // nq, i % nq, ki)))
        inputs.append(bias)

    return pl.pallas_call(
        kernel,
        out_shape=jax.ShapeDtypeStruct((B, Lq, Lk), out_dtype),
        grid=(B * nq, nk),
        in_specs=in_specs,
        out_specs=pl.BlockSpec((1, tq, tk), lambda i, ki: (i // nq, i % nq, ki)),
        compiler_params=_mosaic_params(("parallel", "parallel")),
    )(*inputs)


# ----------------------------------------------------------------------------
# Module wrapper
# ----------------------------------------------------------------------------
class MultiHeadedAttentionPallas:
    def __init__(self, model_dim, head_count, dim_per_head=None, dropout=0.1,
                 compute_dtype=jnp.bfloat16, block_q=256, block_kv=1024,
                 return_top_attn=True, top_attn_dtype=jnp.float32, rng=None):
        if dim_per_head is None:
            assert model_dim % head_count == 0
            dim_per_head = model_dim // head_count
        self.head_count = head_count
        self.dim_per_head = dim_per_head
        self.model_dim = model_dim
        self.compute_dtype = compute_dtype
        self.block_q = block_q
        self.block_kv = block_kv
        self.return_top_attn = return_top_attn
        self.top_attn_dtype = top_attn_dtype
        inner = head_count * dim_per_head
        self.inner = inner

        rng = jax.random.PRNGKey(0) if rng is None else rng
        ks = jax.random.split(rng, 8)

        def init_w(k, dout, din):
            bound = 1.0 / math.sqrt(din)
            return jax.random.uniform(k, (dout, din), jnp.float32, -bound, bound)

        def init_b(k, dout, din):
            bound = 1.0 / math.sqrt(din)
            return jax.random.uniform(k, (dout,), jnp.float32, -bound, bound)

        wk = init_w(ks[0], inner, model_dim); bk = init_b(ks[1], inner, model_dim)
        wv = init_w(ks[2], inner, model_dim); bv = init_b(ks[3], inner, model_dim)
        wq = init_w(ks[4], inner, model_dim); bq = init_b(ks[5], inner, model_dim)
        wo = init_w(ks[6], model_dim, inner); self.bo = init_b(ks[7], model_dim, inner)

        cd = compute_dtype
        scale = 1.0 / math.sqrt(dim_per_head)
        # Pre-transposed [Din, Dout] weights cast once to the MXU compute dtype.
        # The softmax scale is folded into the Q projection (weights AND bias), so the
        # attention kernels never multiply scores by `scale`.
        self.wk_t = jnp.transpose(wk).astype(cd)
        self.wv_t = jnp.transpose(wv).astype(cd)
        self.wq_t = (jnp.transpose(wq) * scale).astype(cd)
        self.wo_t = jnp.transpose(wo).astype(cd)
        self.bk = bk
        self.bv = bv
        self.bq = bq * scale
        # fused projection weights (single matmul -> activation read from HBM once)
        self.w_kvq_t = jnp.concatenate([self.wk_t, self.wv_t, self.wq_t], axis=1)
        self.b_kvq = jnp.concatenate([self.bk, self.bv, self.bq], axis=0)
        self.w_kv_t = jnp.concatenate([self.wk_t, self.wv_t], axis=1)
        self.b_kv = jnp.concatenate([self.bk, self.bv], axis=0)

    def _split_heads(self, x):
        B, L, _ = x.shape
        return jnp.transpose(
            x.reshape(B, L, self.head_count, self.dim_per_head), (0, 2, 1, 3))

    def _proj(self, x, w_t, b):
        B, L, D = x.shape
        y = pallas_linear(x.reshape(B * L, D).astype(self.compute_dtype),
                          w_t, b, out_dtype=self.compute_dtype)
        return y.reshape(B, L, -1)

    def __call__(self, key, value, query, mask=None,
                 enc_attn_cache=None, self_attn_cache=None):
        cd = self.compute_dtype
        inner = self.inner

        if enc_attn_cache is not None:
            key_up, value_up = enc_attn_cache
            q_proj = self._proj(query, self.wq_t, self.bq)
        else:
            if key is value and value is query:          # self-attention: fused QKV matmul
                kvq = self._proj(query, self.w_kvq_t, self.b_kvq)
                k_proj = kvq[..., :inner]
                v_proj = kvq[..., inner:2 * inner]
                q_proj = kvq[..., 2 * inner:]
            elif key is value:                           # cross-attention: fused KV matmul
                kv = self._proj(key, self.w_kv_t, self.b_kv)
                k_proj = kv[..., :inner]
                v_proj = kv[..., inner:]
                q_proj = self._proj(query, self.wq_t, self.bq)
            else:
                k_proj = self._proj(key, self.wk_t, self.bk)
                v_proj = self._proj(value, self.wv_t, self.bv)
                q_proj = self._proj(query, self.wq_t, self.bq)
            # Head-major [B,H,L,dh] layout is REQUIRED for the returned KV cache
            # (torch contract), so the K/V transposes cannot be removed.
            # TODO(synk): the Q-side transpose could be folded into the attention
            # kernel by splitting heads in VMEM from a [B,Lq,H*dh] block.
            key_up = self._split_heads(k_proj)
            value_up = self._split_heads(v_proj)

        if self_attn_cache is not None:
            key_up_prev, value_up_prev = self_attn_cache
            key_up = jnp.concatenate([key_up_prev, key_up], axis=2)
            value_up = jnp.concatenate([value_up_prev, value_up], axis=2)
            # TODO(synk): decode path should use a pre-allocated cache + in-place update
            # (dynamic_update_slice / input_output_aliases) instead of full-cache concat.

        query_up = self._split_heads(q_proj)   # already pre-scaled by 1/sqrt(dh)

        bias = None
        if mask is not None:
            # additive bf16 score bias (half the mask DMA of f32, one add per score)
            bias = jnp.where(mask != 0, -1e18, 0.0).astype(cd)

        # context, lane-dense [B, Lq, H*dh], plus head-0 log-sum-exp
        context, lse0 = pallas_flash_attention(
            query_up, key_up, value_up, bias,
            block_q=self.block_q, block_kv=self.block_kv)

        if self.return_top_attn:
            # exact head-0 probabilities (what the torch module returns)
            top_attn = pallas_head0_attention(
                query_up, key_up, lse0, bias,
                block_q=self.block_q, block_kv=self.block_kv,
                out_dtype=self.top_attn_dtype)
        else:
            top_attn = None

        # dropout: eval-mode identity.
        # TODO(synk): training-mode dropout needs pltpu.prng_seed/prng_random_bits.
        Bc, Lc, Dc = context.shape
        output = pallas_linear(context.reshape(Bc * Lc, Dc), self.wo_t, self.bo,
                               out_dtype=jnp.float32)
        output = output.reshape(Bc, Lc, self.model_dim)

        return output, top_attn, [key_up, value_up]


# ----------------------------------------------------------------------------
# Pure-JAX reference (same bf16 cast points, plain softmax) for verification.
# Note: wq_t / bq already carry the 1/sqrt(dh) scale.
# ----------------------------------------------------------------------------
def reference_forward(m, key, value, query, mask=None):
    cd = m.compute_dtype
    f32 = jnp.float32

    def lin(x, w_t, b):
        y = jnp.dot(x.astype(cd), w_t, preferred_element_type=f32) + b
        return y.astype(cd)

    H, dh = m.head_count, m.dim_per_head

    def split(x):
        B, L, _ = x.shape
        return jnp.transpose(x.reshape(B, L, H, dh), (0, 2, 1, 3))

    ku = split(lin(key, m.wk_t, m.bk))
    vu = split(lin(value, m.wv_t, m.bv))
    qu = split(lin(query, m.wq_t, m.bq))    # pre-scaled

    s = jnp.einsum('bhqd,bhkd->bhqk', qu, ku, preferred_element_type=f32)
    if mask is not None:
        s = jnp.where(mask[:, None, :, :] != 0, -1e18, s)
    attn = jax.nn.softmax(s, axis=-1)
    ctx = jnp.einsum('bhqk,bhkd->bhqd', attn.astype(cd), vu,
                     preferred_element_type=f32)
    B, _, Lq, _ = ctx.shape
    ctx = jnp.transpose(ctx, (0, 2, 1, 3)).reshape(B, Lq, H * dh).astype(cd)
    out = (jnp.dot(ctx, m.wo_t, preferred_element_type=f32) + m.bo).astype(f32)
    return out, attn[:, 0].astype(f32), ku, vu


def _close(a, b, atol, rtol=2e-2):
    return jnp.allclose(a.astype(jnp.float32), b.astype(jnp.float32),
                        atol=atol, rtol=rtol)


# ----------------------------------------------------------------------------
if __name__ == "__main__":
    B, L, model_dim, head_count = 2, 512, 256, 4    # dh = 64, H*dh = 256 (lane-dense)

    root = jax.random.PRNGKey(0)
    k_mod, k_x, k_m, k_mem, k_q2 = jax.random.split(root, 5)

    # block_q/block_kv = 256 here only so the small demo length still exercises
    # multiple q-tiles AND the multi-kv-tile online-softmax path; class defaults
    # (block_q=256, block_kv=1024) are the production settings.
    mha = MultiHeadedAttentionPallas(model_dim, head_count,
                                     block_q=256, block_kv=256, rng=k_mod)

    # ---- case 1: self-attention with mask (fused QKV path) -------------------
    x = jax.random.normal(k_x, (B, L, model_dim), jnp.float32)
    mask = (jax.random.uniform(k_m, (B, L, L)) < 0.2).astype(jnp.int32)

    out, top_attn, (key_up, value_up) = mha(x, x, x, mask=mask)
    out = jax.block_until_ready(out)
    top_attn = jax.block_until_ready(top_attn)

    ref_out, ref_top, ref_ku, ref_vu = reference_forward(mha, x, x, x, mask=mask)

    assert out.shape == (B, L, model_dim)
    assert top_attn.shape == (B, L, L)
    assert key_up.shape == (B, head_count, L, model_dim // head_count)
    assert _close(out, ref_out, atol=2e-2), "case1: output mismatch"
    assert _close(top_attn, ref_top, atol=1e-2), "case1: top_attn mismatch"
    assert _close(key_up, ref_ku, atol=1e-2), "case1: key_up mismatch"
    assert _close(value_up, ref_vu, atol=1e-2), "case1: value_up mismatch"

    # ---- case 2: cross-attention (key is value, distinct query, no mask) -----
    Lq2 = 128
    memory = jax.random.normal(k_mem, (B, L, model_dim), jnp.float32)
    query2 = jax.random.normal(k_q2, (B, Lq2, model_dim), jnp.float32)

    out2, top2, (ku2, vu2) = mha(memory, memory, query2, mask=None)
    out2 = jax.block_until_ready(out2)

    ref_out2, ref_top2, ref_ku2, ref_vu2 = reference_forward(
        mha, memory, memory, query2, mask=None)

    assert out2.shape == (B, Lq2, model_dim)
    assert top2.shape == (B, Lq2, L)
    assert _close(out2, ref_out2, atol=2e-2), "case2: output mismatch"
    assert _close(top2, ref_top2, atol=1e-2), "case2: top_attn mismatch"
    assert _close(ku2, ref_ku2, atol=1e-2), "case2: key_up mismatch"
    assert _close(vu2, ref_vu2, atol=1e-2), "case2: value_up mismatch"

    print("KERNEL_OK")
</pallas_src>

<mosaic_0001>
module attributes {stable_mosaic.version = 11 : i64} {
  func.func @_linear_kernel(%arg0: i32, %arg1: i32, %arg2: i32, %arg3: memref<512x256xbf16, #tpu.memory_space<vmem>>, %arg4: memref<256x256xbf16, #tpu.memory_space<vmem>>, %arg5: memref<1x256xf32, #tpu.memory_space<vmem>>, %arg6: memref<512x256xbf16, #tpu.memory_space<vmem>>, %arg7: memref<512x256xf32, #tpu.memory_space<vmem>>) attributes {dimension_semantics = [#tpu.dimension_semantics<parallel>, #tpu.dimension_semantics<parallel>, #tpu.dimension_semantics<arbitrary>], iteration_bounds = array<i64: 2, 3, 1>, scalar_prefetch = 0 : i64, scratch_operands = 1 : i64, tpu.core_type = #tpu.core_type<tc>, window_params = [{transform_indices = @transform_0, window_bounds = array<i64: 512, 256>}, {transform_indices = @transform_1, window_bounds = array<i64: 256, 256>}, {transform_indices = @transform_2, window_bounds = array<i64: 1, 256>}, {transform_indices = @transform_3, window_bounds = array<i64: 512, 256>}]} {
    %c0_i32 = arith.constant 0 : i32
    %0 = arith.cmpi eq, %arg2, %c0_i32 : i32
    %1 = arith.extui %0 : i1 to i32
    %c0_i32_0 = arith.constant 0 : i32
    %2 = arith.cmpi ne, %1, %c0_i32_0 : i32
    scf.if %2 {
      %cst_10 = arith.constant 0.000000e+00 : f32
      %12 = vector.broadcast %cst_10 : f32 to vector<512x256xf32>
      %c0_11 = arith.constant 0 : index
      %c0_12 = arith.constant 0 : index
      %13 = vector.load %arg7[%c0_11, %c0_12] : memref<512x256xf32, #tpu.memory_space<vmem>>, vector<512x256xf32>
      tpu.vector_store %arg7[%c0_11, %c0_12], %12 {strides = array<i32>} : memref<512x256xf32, #tpu.memory_space<vmem>>, vector<512x256xf32>,
    } else {
    }
    %c0 = arith.constant 0 : index
    %c0_1 = arith.constant 0 : index
    %3 = vector.load %arg7[%c0, %c0_1] : memref<512x256xf32, #tpu.memory_space<vmem>>, vector<512x256xf32>
    %c0_2 = arith.constant 0 : index
    %c0_3 = arith.constant 0 : index
    %4 = vector.load %arg3[%c0_2, %c0_3] : memref<512x256xbf16, #tpu.memory_space<vmem>>, vector<512x256xbf16>
    %c0_4 = arith.constant 0 : index
    %c0_5 = arith.constant 0 : index
    %5 = vector.load %arg4[%c0_4, %c0_5] : memref<256x256xbf16, #tpu.memory_space<vmem>>, vector<256x256xbf16>
    %cst = arith.constant dense<0.000000e+00> : vector<512x256xf32>
    %6 = tpu.matmul %4, %5, %cst {dimension_numbers = #tpu.dot_dimension_numbers<[1], [0], [0], [1], [0, 0, 1, 1], [], []>} : vector<512x256xbf16>, vector<256x256xbf16>, vector<512x256xf32> -> vector<512x256xf32>
    %7 = arith.addf %3, %6 : vector<512x256xf32>
    %c0_6 = arith.constant 0 : index
    %c0_7 = arith.constant 0 : index
    %8 = vector.load %arg7[%c0_6, %c0_7] : memref<512x256xf32, #tpu.memory_space<vmem>>, vector<512x256xf32>
    tpu.vector_store %arg7[%c0_6, %c0_7], %7 {strides = array<i32>} : memref<512x256xf32, #tpu.memory_space<vmem>>, vector<512x256xf32>,
    %c0_i32_8 = arith.constant 0 : i32
    %9 = arith.cmpi eq, %arg2, %c0_i32_8 : i32
    %10 = arith.extui %9 : i1 to i32
    %c0_i32_9 = arith.constant 0 : i32
    %11 = arith.cmpi ne, %10, %c0_i32_9 : i32
    scf.if %11 {
      %c0_10 = arith.constant 0 : index
      %c0_11 = arith.constant 0 : index
      %12 = vector.load %arg7[%c0_10, %c0_11] : memref<512x256xf32, #tpu.memory_space<vmem>>, vector<512x256xf32>
      %c0_12 = arith.constant 0 : index
      %c0_13 = arith.constant 0 : index
      %13 = vector.load %arg5[%c0_12, %c0_13] : memref<1x256xf32, #tpu.memory_space<vmem>>, vector<1x256xf32>
      %14 = vector.broadcast %13 : vector<1x256xf32> to vector<512x256xf32>
      %15 = arith.addf %12, %14 : vector<512x256xf32>
      %16 = arith.truncf %15 : vector<512x256xf32> to vector<512x256xbf16>
      %c0_14 = arith.constant 0 : index
      %c0_15 = arith.constant 0 : index
      %17 = vector.load %arg6[%c0_14, %c0_15] : memref<512x256xbf16, #tpu.memory_space<vmem>>, vector<512x256xbf16>
      tpu.vector_store %arg6[%c0_14, %c0_15], %16 {strides = array<i32>} : memref<512x256xbf16, #tpu.memory_space<vmem>>, vector<512x256xbf16>,
    } else {
    }
    return
  }
  func.func @transform_0(%arg0: i32, %arg1: i32, %arg2: i32) -> (i32, i32) {
    %c0_i32 = arith.constant 0 : i32
    return %arg0, %arg2 : i32, i32
  }
  func.func @transform_1(%arg0: i32, %arg1: i32, %arg2: i32) -> (i32, i32) {
    %c0_i32 = arith.constant 0 : i32
    return %arg2, %arg1 : i32, i32
  }
  func.func @transform_2(%arg0: i32, %arg1: i32, %arg2: i32) -> (i32, i32) {
    %c0_i32 = arith.constant 0 : i32
    %c0_i32_0 = arith.constant 0 : i32
    return %c0_i32, %arg1 : i32, i32
  }
  func.func @transform_3(%arg0: i32, %arg1: i32, %arg2: i32) -> (i32, i32) {
    %c0_i32 = arith.constant 0 : i32
    return %arg0, %arg1 : i32, i32
  }
}

</mosaic_0001>

<llo_original>
// kernel: tpu_custom_call.1
$region0: #{tpu_custom_call.1}
  #allocation0 [shape = 'u32[]', space=smem, size = 0x4, offset = 0x4, fixed_abs, tag = 'smem constant byte address 0x4 - core index']
  #allocation1 [shape = 'u32[144,128]{1,0:T(1,128)}', space=vmem, size = 0x12000, scoped, tag = 'internal scratch']
  #allocation2 [shape = 'f32[512,256]{1,0:T(8,128)}', space=vmem, size = 0x80000, scoped, tag = 'scratch operand']
  %s0 = inlined_call_operand.hbm [shape: bf16[1024,256], index: 0, kind: input, shape index: {}]
  %s1 = inlined_call_operand.hbm [shape: bf16[256,768], index: 1, kind: input, shape index: {}]
  %s2 = inlined_call_operand.hbm [shape: f32[1,768], index: 2, kind: input, shape index: {}]
  %s3 = inlined_call_operand.hbm [shape: bf16[1024,768], index: 3, kind: output, shape index: {}]
  %s4 = sld [smem:[#allocation0]]
  $region65: #{tpu_custom_call.1} parent=0
    _
  %s6 = ssub.s32 1, %s4
  %s7 = scalar_select 0, %s6, %s4
  $region1: #{tpu_custom_call.1} parent=0
    #allocation3 [shape = 'u8[524288]{0}', space=vmem, size = 0x80000, scoped, tag = 'input window, operand 0']
    #allocation4 [shape = 's32[2]{0}', space=sflag, size = 0x8, scoped, tag = 'scoped memory for tpu_custom_call.1']
    #allocation5 [shape = 's32[2]{0}', space=sflag, size = 0x8, scoped, tag = 'scoped memory for tpu_custom_call.1']
    #allocation6 [shape = 'u8[262144]{0}', space=vmem, size = 0x40000, scoped, tag = 'input window, operand 1']
    #allocation7 [shape = 's32[2]{0}', space=sflag, size = 0x8, scoped, tag = 'scoped memory for tpu_custom_call.1']
    #allocation8 [shape = 'u8[2048]{0}', space=vmem, size = 0x800, scoped, tag = 'input window, operand 2']
    #allocation9 [shape = 'u8[524288]{0}', space=vmem, size = 0x80000, scoped, tag = 'output window, operand 0']
    %8 = vsyncpa [#allocation4], 0
    %s9 = scalar_lea.sflag [#allocation4], 1
    %10 = vsyncpa %s9, 0
    %11 = vsyncpa [#allocation7], 0
    %s12 = scalar_lea.sflag [#allocation7], 1
    %13 = vsyncpa %s12, 0
    %14 = vsyncpa [#allocation5], 0
    %s15 = scalar_lea.sflag [#allocation5], 1
    %16 = vsyncpa %s15, 0
    loop: start=0, step=1, limit=8
    $region2: #{tpu_custom_call.1} parent=1 // loop_pre_header
      _
    $region3: #{tpu_custom_call.1} parent=1 // loop_header
      %s18 = sphi 0, %s22
      %p19 = scmp.ge.s32.totalorder %s18, 8
      %s25 = sphi 0, %s44
      %s26 = sphi 0, %s40
      %s27 = sphi 0, %s36
      %s28 = sphi 0, %s25
      %s29 = sphi 0, %s26
      %s30 = sphi 0, %s27
      %s31 = sphi 0, %s28
      %s32 = sphi 0, %s29
      %s33 = sphi 0, %s30
      %s49 = sphi 0, %s51
      %s52 = sphi 0, %s49
      %s53 = sphi 0, %s52
      %s69 = sphi 0, %s53
      %s77 = sphi 0, %s79
      %s80 = sphi 0, %s77
      %s81 = sphi 0, %s80
      %s97 = sphi 0, %s81
      %s103 = sphi 0, %s105
      %s106 = sphi 0, %s103
      %s107 = sphi 0, %s106
      %s123 = sphi 0, %s107
      %s131 = sphi 0, %s133
      %s134 = sphi 0, %s131
      %s135 = sphi 0, %s134
      %s151 = sphi 0, %s135
    $region4: #{tpu_custom_call.1} parent=1 // loop_header_branch
      %21 = sbr.rel (%p19) target = $region8
    $region5: #{tpu_custom_call.1} parent=1 // loop_body
      %s23 = ssub.s32 %s18, 1
      %s24 = ssub.s32 %s18, 2
      %s34 = sadd.s32 1, %s27
      %p35 = scmp.ge.s32.totalorder %s34, 1
      %s36 = scalar_select %p35, 0, %s34
      %s37 = sadd.s32 1, %s26
      %s38 = scalar_select %p35, %s37, %s26
      %p39 = scmp.ge.s32.totalorder %s38, 3
      %s40 = scalar_select %p39, 0, %s38
      %s41 = sadd.s32 1, %s25
      %s42 = scalar_select %p39, %s41, %s25
      %p43 = scmp.ge.s32.totalorder %s42, 2
      %s44 = scalar_select %p43, 0, %s42
      %s45 = ssub.s32 %s25, %s44
      %s46 = ssub.s32 %s27, %s36
      %s47 = sor.u32 %s45, %s46
      %p48 = scmp.eq.s32.totalorder %s47, 0
      %s50 = sadd.s32 %s49, 1
      %s51 = scalar_select %p48, %s49, %s50
      %p54 = pneg %p48
      %p55 = scmp.eq.s32.totalorder %s18, 5
      %p56 = por %p54, %p55
      %p57 = scmp.ne.s32.totalorder %s49, %s52
      %p58 = scmp.eq.s32.totalorder %s18, 0
      %p59 = por %p57, %p58
      %p60 = scmp.ne.s32.totalorder %s49, %s52
      %p61 = scmp.eq.s32.totalorder %s23, 5
      %p62 = por %p60, %p61
      %p63 = scmp.ne.s32.totalorder %s52, %s53
      %p64 = scmp.eq.s32.totalorder %s23, 0
      %p65 = por %p63, %p64
      %p66 = scmp.ne.s32.totalorder %s52, %s53
      %p67 = scmp.eq.s32.totalorder %s24, 5
      %p68 = por %p66, %p67
      %p70 = scmp.ne.s32.totalorder %s53, %s69
      %p71 = scmp.eq.s32.totalorder %s24, 0
      %p72 = por %p70, %p71
      %s73 = ssub.s32 %s27, %s36
      %s74 = ssub.s32 %s26, %s40
      %s75 = sor.u32 %s73, %s74
      %p76 = scmp.eq.s32.totalorder %s75, 0
      %s78 = sadd.s32 %s77, 1
      %s79 = scalar_select %p76, %s77, %s78
      %p82 = pneg %p76
      %p83 = scmp.eq.s32.totalorder %s18, 5
      %p84 = por %p82, %p83
      %p85 = scmp.ne.s32.totalorder %s77, %s80
      %p86 = scmp.eq.s32.totalorder %s18, 0
      %p87 = por %p85, %p86
      %p88 = scmp.ne.s32.totalorder %s77, %s80
      %p89 = scmp.eq.s32.totalorder %s23, 5
      %p90 = por %p88, %p89
      %p91 = scmp.ne.s32.totalorder %s80, %s81
      %p92 = scmp.eq.s32.totalorder %s23, 0
      %p93 = por %p91, %p92
      %p94 = scmp.ne.s32.totalorder %s80, %s81
      %p95 = scmp.eq.s32.totalorder %s24, 5
      %p96 = por %p94, %p95
      %p98 = scmp.ne.s32.totalorder %s81, %s97
      %p99 = scmp.eq.s32.totalorder %s24, 0
      %p100 = por %p98, %p99
      %s101 = ssub.s32 %s26, %s40
      %p102 = scmp.eq.s32.totalorder %s101, 0
      %s104 = sadd.s32 %s103, 1
      %s105 = scalar_select %p102, %s103, %s104
      %p108 = pneg %p102
      %p109 = scmp.eq.s32.totalorder %s18, 5
      %p110 = por %p108, %p109
      %p111 = scmp.ne.s32.totalorder %s103, %s106
      %p112 = scmp.eq.s32.totalorder %s18, 0
      %p113 = por %p111, %p112
      %p114 = scmp.ne.s32.totalorder %s103, %s106
      %p115 = scmp.eq.s32.totalorder %s23, 5
      %p116 = por %p114, %p115
      %p117 = scmp.ne.s32.totalorder %s106, %s107
      %p118 = scmp.eq.s32.totalorder %s23, 0
      %p119 = por %p117, %p118
      %p120 = scmp.ne.s32.totalorder %s106, %s107
      %p121 = scmp.eq.s32.totalorder %s24, 5
      %p122 = por %p120, %p121
      %p124 = scmp.ne.s32.totalorder %s107, %s123
      %p125 = scmp.eq.s32.totalorder %s24, 0
      %p126 = por %p124, %p125
      %s127 = ssub.s32 %s25, %s44
      %s128 = ssub.s32 %s26, %s40
      %s129 = sor.u32 %s127, %s128
      %p130 = scmp.eq.s32.totalorder %s129, 0
      %s132 = sadd.s32 %s131, 1
      %s133 = scalar_select %p130, %s131, %s132
      %p136 = pneg %p130
      %p137 = scmp.eq.s32.totalorder %s18, 5
      %p138 = por %p136, %p137
      %p139 = scmp.ne.s32.totalorder %s131, %s134
      %p140 = scmp.eq.s32.totalorder %s18, 0
      %p141 = por %p139, %p140
      %p142 = scmp.ne.s32.totalorder %s131, %s134
      %p143 = scmp.eq.s32.totalorder %s23, 5
      %p144 = por %p142, %p143
      %p145 = scmp.ne.s32.totalorder %s134, %s135
      %p146 = scmp.eq.s32.totalorder %s23, 0
      %p147 = por %p145, %p146
      %p148 = scmp.ne.s32.totalorder %s134, %s135
      %p149 = scmp.eq.s32.totalorder %s24, 5
      %p150 = por %p148, %p149
      %p152 = scmp.ne.s32.totalorder %s135, %s151
      %p153 = scmp.eq.s32.totalorder %s24, 0
      %p154 = por %p152, %p153
      %p155 = scmp.le.s32.totalorder 1, %s18
      %p156 = scmp.lt.s32.totalorder %s18, 7
      %p157 = pnand %p155, %p156
      %p158 = pneg %p157
      // Predicated region
      $region9: #{tpu_custom_call.1} parent=5 // pred_check
        _
      $region10: #{tpu_custom_call.1} parent=5 // pred_check_branch
        %160 = sbr.rel (%p157) target = $region12
      $region11: #{tpu_custom_call.1} parent=5 // pred_region
        %s161 = ssub.s32 %s18, 1
      $region12: #{tpu_custom_call.1} parent=5 // pred_fallthru
        _
      %p162 = scmp.lt.s32.totalorder %s18, 6
      // Predicated region
      $region13: #{tpu_custom_call.1} parent=5 // pred_check
        %p163 = pneg %p162
      $region14: #{tpu_custom_call.1} parent=5 // pred_check_branch
        %165 = sbr.rel (%p163) target = $region16
      $region15: #{tpu_custom_call.1} parent=5 // pred_region
        // Predicated region
        $region17: #{tpu_custom_call.1} parent=15 // pred_check
          %p166 = pneg %p59
        $region18: #{tpu_custom_call.1} parent=15 // pred_check_branch
          %168 = sbr.rel (%p166) target = $region20
        $region19: #{tpu_custom_call.1} parent=15 // pred_region
          %s169 = sand.u32 %s49, 1
          %s170 = scalar_lea.sflag [#allocation4], %s169
          %s171 = sand.u32 %s49, 1
          %s172 = smul.addr %s171, 512
          %s173 = scalar_lea.vmem [#allocation3], %s172
          %s174 = smul.u32 64, %s25
          %s175 = smul.u32 2, %s27
          %s177 = ssub.s32 8192, 8192
          %178 = vsyncadd %s170, %s177
          %s179 = smul.addr %s174, 2
          %s180 = sadd.s32 %s175, %s179
          %s181 = smul.addr %s180, 64
          %s182 = scalar_lea.hbm %s0, %s181
          %s183 = sshll.u32 %s173, 4
          %s184 = int_to_ptr.vmem [resolvable:$true] %s183
          %189 = dma.hbm_to_vmem [thread:$0]  %s182, 8192, %s184, %s170, 128, 128, 8
        $region20: #{tpu_custom_call.1} parent=15 // pred_fallthru
          _
        // Predicated region
        $region21: #{tpu_custom_call.1} parent=15 // pred_check
          %p190 = pneg %p87
        $region22: #{tpu_custom_call.1} parent=15 // pred_check_branch
          %192 = sbr.rel (%p190) target = $region24
        $region23: #{tpu_custom_call.1} parent=15 // pred_region
          %s193 = sand.u32 %s18, 1
          %s194 = scalar_lea.sflag [#allocation7], %s193
          %s195 = sand.u32 %s77, 1
          %s196 = smul.addr %s195, 256
          %s197 = scalar_lea.vmem [#allocation6], %s196
          %s198 = smul.u32 32, %s27
          %s199 = smul.u32 2, %s26
          %s201 = ssub.s32 4096, 4096
          %202 = vsyncadd %s194, %s201
          %s203 = smul.addr %s198, 6
          %s204 = sadd.s32 %s199, %s203
          %s205 = smul.addr %s204, 64
          %s206 = scalar_lea.hbm %s1, %s205
          %s207 = sshll.u32 %s197, 4
          %s208 = int_to_ptr.vmem [resolvable:$true] %s207
          %213 = dma.hbm_to_vmem [thread:$0]  %s206, 4096, %s208, %s194, 384, 128, 8
        $region24: #{tpu_custom_call.1} parent=15 // pred_fallthru
          _
        // Predicated region
        $region25: #{tpu_custom_call.1} parent=15 // pred_check
          %p214 = pneg %p113
        $region26: #{tpu_custom_call.1} parent=15 // pred_check_branch
          %216 = sbr.rel (%p214) target = $region28
        $region27: #{tpu_custom_call.1} parent=15 // pred_region
          %s217 = sand.u32 %s18, 1
          %s218 = scalar_lea.sflag [#allocation7], %s217
          %s219 = sand.u32 %s103, 1
          %s220 = smul.addr %s219, 2
          %s221 = scalar_lea.vmem [#allocation8], %s220
          %s222 = smul.u32 2, %s26
          %s224 = ssub.s32 32, 32
          %225 = vsyncadd %s218, %s224
          %s226 = smul.addr %s222, 16
          %s227 = scalar_lea.hbm %s2, %s226
          %s229 = sshll.u32 %s221, 4
          %s230 = int_to_ptr.vmem [resolvable:$true] %s229
          %232 = dma.hbm_to_vmem [thread:$0]  %s227, 32, %s230, %s218
        $region28: #{tpu_custom_call.1} parent=15 // pred_fallthru
          _
      $region16: #{tpu_custom_call.1} parent=5 // pred_fallthru
        _
      %p233 = scmp.le.s32.totalorder 1, %s18
      %p234 = scmp.lt.s32.totalorder %s18, 7
      %p235 = pnand %p233, %p234
      %p236 = pneg %p235
      // Predicated region
      $region29: #{tpu_custom_call.1} parent=5 // pred_check
        _
      $region30: #{tpu_custom_call.1} parent=5 // pred_check_branch
        %238 = sbr.rel (%p235) target = $region32
      $region31: #{tpu_custom_call.1} parent=5 // pred_region
        %s239 = ssub.s32 %s18, 1
        %s240 = sand.u32 %s52, 1
        %s241 = scalar_lea.sflag [#allocation4], %s240
        %s242 = sand.u32 %s52, 1
        %s243 = smul.addr %s242, 512
        %s244 = scalar_lea.vmem [#allocation3], %s243
        // Predicated region
        $region33: #{tpu_custom_call.1} parent=31 // pred_check
          %p245 = pneg %p65
        $region34: #{tpu_custom_call.1} parent=31 // pred_check_branch
          %247 = sbr.rel (%p245) target = $region36
        $region35: #{tpu_custom_call.1} parent=31 // pred_region
          %248 = dma.done %s241, 8192
        $region36: #{tpu_custom_call.1} parent=31 // pred_fallthru
          _
        %s249 = sand.u32 %s23, 1
        %s250 = scalar_lea.sflag [#allocation7], %s249
        %s251 = sand.u32 %s80, 1
        %s252 = smul.addr %s251, 256
        %s253 = scalar_lea.vmem [#allocation6], %s252
        // Predicated region
        $region37: #{tpu_custom_call.1} parent=31 // pred_check
          %p254 = pneg %p93
        $region38: #{tpu_custom_call.1} parent=31 // pred_check_branch
          %256 = sbr.rel (%p254) target = $region40
        $region39: #{tpu_custom_call.1} parent=31 // pred_region
          %257 = dma.done %s250, 4096
        $region40: #{tpu_custom_call.1} parent=31 // pred_fallthru
          _
        %s258 = sand.u32 %s23, 1
        %s259 = scalar_lea.sflag [#allocation7], %s258
        %s260 = sand.u32 %s106, 1
        %s261 = smul.addr %s260, 2
        %s262 = scalar_lea.vmem [#allocation8], %s261
        // Predicated region
        $region41: #{tpu_custom_call.1} parent=31 // pred_check
          %p263 = pneg %p119
        $region42: #{tpu_custom_call.1} parent=31 // pred_check_branch
          %265 = sbr.rel (%p263) target = $region44
        $region43: #{tpu_custom_call.1} parent=31 // pred_region
          %266 = dma.done %s259, 32
        $region44: #{tpu_custom_call.1} parent=31 // pred_fallthru
          _
        %s267 = sand.u32 %s52, 1
        %s268 = scalar_lea.sflag [#allocation4], %s267
        %s269 = sand.u32 %s52, 1
        %s270 = smul.addr %s269, 512
        %s271 = scalar_lea.vmem [#allocation3], %s270
        %p272 = pneg %p65
        %p273 = pneg %p62
        %s274 = sand.u32 %s23, 1
        %s275 = scalar_lea.sflag [#allocation7], %s274
        %s276 = sand.u32 %s80, 1
        %s277 = smul.addr %s276, 256
        %s278 = scalar_lea.vmem [#allocation6], %s277
        %p279 = pneg %p93
        %p280 = pneg %p90
        %s281 = sand.u32 %s23, 1
        %s282 = scalar_lea.sflag [#allocation7], %s281
        %s283 = sand.u32 %s106, 1
        %s284 = smul.addr %s283, 2
        %s285 = scalar_lea.vmem [#allocation8], %s284
        %p286 = pneg %p119
        %p287 = pneg %p116
        %p288 = pneg %p147
        %p289 = pneg %p144
        %s290 = sand.u32 %s134, 1
        %s291 = scalar_lea.sflag [#allocation5], %s290
        %s292 = sand.u32 %s134, 1
        %s293 = smul.addr %s292, 512
        %s294 = scalar_lea.vmem [#allocation9], %s293
        %s295 = smul.u32 64, %s28
        %s296 = smul.u32 2, %s30
        %s297 = smul.u32 32, %s30
        %s298 = smul.u32 2, %s29
        %s299 = smul.u32 2, %s29
        %s300 = smul.u32 64, %s28
        %s301 = smul.u32 2, %s29
        %p302 = scmp.eq.s32.totalorder %s30, 0
        // Predicated region
        $region45: #{tpu_custom_call.1} parent=31 // pred_check
          %p303 = pneg %p302
        $region46: #{tpu_custom_call.1} parent=31 // pred_check_branch
          %305 = sbr.rel (%p303) target = $region48
        $region47: #{tpu_custom_call.1} parent=31 // pred_region
          %306 = vst [vmem:[#allocation2] sm:$0xff] 0.0
          %307 = vst [vmem:[#allocation2 + $0x8] sm:$0xff] 0.0
          %308 = vst [vmem:[#allocation2 + $0x10] sm:$0xff] 0.0
          %309 = vst [vmem:[#allocation2 + $0x18] sm:$0xff] 0.0
          %310 = vst [vmem:[#allocation2 + $0x20] sm:$0xff] 0.0
          %311 = vst [vmem:[#allocation2 + $0x28] sm:$0xff] 0.0
          %312 = vst [vmem:[#allocation2 + $0x30] sm:$0xff] 0.0
          %313 = vst [vmem:[#allocation2 + $0x38] sm:$0xff] 0.0
          %314 = vst [vmem:[#allocation2 + $0x40] sm:$0xff] 0.0
          %315 = vst [vmem:[#allocation2 + $0x48] sm:$0xff] 0.0
          %316 = vst [vmem:[#allocation2 + $0x50] sm:$0xff] 0.0
          %317 = vst [vmem:[#allocation2 + $0x58] sm:$0xff] 0.0
          %318 = vst [vmem:[#allocation2 + $0x60] sm:$0xff] 0.0
          %319 = vst [vmem:[#allocation2 + $0x68] sm:$0xff] 0.0
          %320 = vst [vmem:[#allocation2 + $0x70] sm:$0xff] 0.0
          %321 = vst [vmem:[#allocation2 + $0x78] sm:$0xff] 0.0
          %322 = vst [vmem:[#allocation2 + $0x80] sm:$0xff] 0.0
          %323 = vst [vmem:[#allocation2 + $0x88] sm:$0xff] 0.0
          %324 = vst [vmem:[#allocation2 + $0x90] sm:$0xff] 0.0
          %325 = vst [vmem:[#allocation2 + $0x98] sm:$0xff] 0.0
          %326 = vst [vmem:[#allocation2 + $0xa0] sm:$0xff] 0.0
          %327 = vst [vmem:[#allocation2 + $0xa8] sm:$0xff] 0.0
          %328 = vst [vmem:[#allocation2 + $0xb0] sm:$0xff] 0.0
          %329 = vst [vmem:[#allocation2 + $0xb8] sm:$0xff] 0.0
          %330 = vst [vmem:[#allocation2 + $0xc0] sm:$0xff] 0.0
          %331 = vst [vmem:[#allocation2 + $0xc8] sm:$0xff] 0.0
          %332 = vst [vmem:[#allocation2 + $0xd0] sm:$0xff] 0.0
          %333 = vst [vmem:[#allocation2 + $0xd8] sm:$0xff] 0.0
          %334 = vst [vmem:[#allocation2 + $0xe0] sm:$0xff] 0.0
          %335 = vst [vmem:[#allocation2 + $0xe8] sm:$0xff] 0.0
          %336 = vst [vmem:[#allocation2 + $0xf0] sm:$0xff] 0.0
          %337 = vst [vmem:[#allocation2 + $0xf8] sm:$0xff] 0.0
          %338 = vst [vmem:[#allocation2 + $0x100] sm:$0xff] 0.0
          %339 = vst [vmem:[#allocation2 + $0x108] sm:$0xff] 0.0
          %340 = vst [vmem:[#allocation2 + $0x110] sm:$0xff] 0.0
          %341 = vst [vmem:[#allocation2 + $0x118] sm:$0xff] 0.0
          %342 = vst [vmem:[#allocation2 + $0x120] sm:$0xff] 0.0
          %343 = vst [vmem:[#allocation2 + $0x128] sm:$0xff] 0.0
          %344 = vst [vmem:[#allocation2 + $0x130] sm:$0xff] 0.0
          %345 = vst [vmem:[#allocation2 + $0x138] sm:$0xff] 0.0
          %346 = vst [vmem:[#allocation2 + $0x140] sm:$0xff] 0.0
          %347 = vst [vmem:[#allocation2 + $0x148] sm:$0xff] 0.0
          %348 = vst [vmem:[#allocation2 + $0x150] sm:$0xff] 0.0
          %349 = vst [vmem:[#allocation2 + $0x158] sm:$0xff] 0.0
          %350 = vst [vmem:[#allocation2 + $0x160] sm:$0xff] 0.0
          %351 = vst [vmem:[#allocation2 + $0x168] sm:$0xff] 0.0
          %352 = vst [vmem:[#allocation2 + $0x170] sm:$0xff] 0.0
          %353 = vst [vmem:[#allocation2 + $0x178] sm:$0xff] 0.0
          %354 = vst [vmem:[#allocation2 + $0x180] sm:$0xff] 0.0
          %355 = vst [vmem:[#allocation2 + $0x188] sm:$0xff] 0.0
          %356 = vst [vmem:[#allocation2 + $0x190] sm:$0xff] 0.0
          %357 = vst [vmem:[#allocation2 + $0x198] sm:$0xff] 0.0
          %358 = vst [vmem:[#allocation2 + $0x1a0] sm:$0xff] 0.0
          %359 = vst [vmem:[#allocation2 + $0x1a8] sm:$0xff] 0.0
          %360 = vst [vmem:[#allocation2 + $0x1b0] sm:$0xff] 0.0
          %361 = vst [vmem:[#allocation2 + $0x1b8] sm:$0xff] 0.0
          %362 = vst [vmem:[#allocation2 + $0x1c0] sm:$0xff] 0.0
          %363 = vst [vmem:[#allocation2 + $0x1c8] sm:$0xff] 0.0
          %364 = vst [vmem:[#allocation2 + $0x1d0] sm:$0xff] 0.0
          %365 = vst [vmem:[#allocation2 + $0x1d8] sm:$0xff] 0.0
          %366 = vst [vmem:[#allocation2 + $0x1e0] sm:$0xff] 0.0
          %367 = vst [vmem:[#allocation2 + $0x1e8] sm:$0xff] 0.0
          %368 = vst [vmem:[#allocation2 + $0x1f0] sm:$0xff] 0.0
          %369 = vst [vmem:[#allocation2 + $0x1f8] sm:$0xff] 0.0
          %370 = vst [vmem:[#allocation2 + $0x200] sm:$0xff] 0.0
          %371 = vst [vmem:[#allocation2 + $0x208] sm:$0xff] 0.0
          %372 = vst [vmem:[#allocation2 + $0x210] sm:$0xff] 0.0
          %373 = vst [vmem:[#allocation2 + $0x218] sm:$0xff] 0.0
          %374 = vst [vmem:[#allocation2 + $0x220] sm:$0xff] 0.0
          %375 = vst [vmem:[#allocation2 + $0x228] sm:$0xff] 0.0
          %376 = vst [vmem:[#allocation2 + $0x230] sm:$0xff] 0.0
          %377 = vst [vmem:[#allocation2 + $0x238] sm:$0xff] 0.0
          %378 = vst [vmem:[#allocation2 + $0x240] sm:$0xff] 0.0
          %379 = vst [vmem:[#allocation2 + $0x248] sm:$0xff] 0.0
          %380 = vst [vmem:[#allocation2 + $0x250] sm:$0xff] 0.0
          %381 = vst [vmem:[#allocation2 + $0x258] sm:$0xff] 0.0
          %382 = vst [vmem:[#allocation2 + $0x260] sm:$0xff] 0.0
          %383 = vst [vmem:[#allocation2 + $0x268] sm:$0xff] 0.0
          %384 = vst [vmem:[#allocation2 + $0x270] sm:$0xff] 0.0
          %385 = vst [vmem:[#allocation2 + $0x278] sm:$0xff] 0.0
          %386 = vst [vmem:[#allocation2 + $0x280] sm:$0xff] 0.0
          %387 = vst [vmem:[#allocation2 + $0x288] sm:$0xff] 0.0
          %388 = vst [vmem:[#allocation2 + $0x290] sm:$0xff] 0.0
          %389 = vst [vmem:[#allocation2 + $0x298] sm:$0xff] 0.0
          %390 = vst [vmem:[#allocation2 + $0x2a0] sm:$0xff] 0.0
          %391 = vst [vmem:[#allocation2 + $0x2a8] sm:$0xff] 0.0
          %392 = vst [vmem:[#allocation2 + $0x2b0] sm:$0xff] 0.0
          %393 = vst [vmem:[#allocation2 + $0x2b8] sm:$0xff] 0.0
          %394 = vst [vmem:[#allocation2 + $0x2c0] sm:$0xff] 0.0
          %395 = vst [vmem:[#allocation2 + $0x2c8] sm:$0xff] 0.0
          %396 = vst [vmem:[#allocation2 + $0x2d0] sm:$0xff] 0.0
          %397 = vst [vmem:[#allocation2 + $0x2d8] sm:$0xff] 0.0
          %398 = vst [vmem:[#allocation2 + $0x2e0] sm:$0xff] 0.0
          %399 = vst [vmem:[#allocation2 + $0x2e8] sm:$0xff] 0.0
          %400 = vst [vmem:[#allocation2 + $0x2f0] sm:$0xff] 0.0
          %401 = vst [vmem:[#allocation2 + $0x2f8] sm:$0xff] 0.0
          %402 = vst [vmem:[#allocation2 + $0x300] sm:$0xff] 0.0
          %403 = vst [vmem:[#allocation2 + $0x308] sm:$0xff] 0.0
          %404 = vst [vmem:[#allocation2 + $0x310] sm:$0xff] 0.0
          %405 = vst [vmem:[#allocation2 + $0x318] sm:$0xff] 0.0
          %406 = vst [vmem:[#allocation2 + $0x320] sm:$0xff] 0.0
          %407 = vst [vmem:[#allocation2 + $0x328] sm:$0xff] 0.0
          %408 = vst [vmem:[#allocation2 + $0x330] sm:$0xff] 0.0
          %409 = vst [vmem:[#allocation2 + $0x338] sm:$0xff] 0.0
          %410 = vst [vmem:[#allocation2 + $0x340] sm:$0xff] 0.0
          %411 = vst [vmem:[#allocation2 + $0x348] sm:$0xff] 0.0
          %412 = vst [vmem:[#allocation2 + $0x350] sm:$0xff] 0.0
          %413 = vst [vmem:[#allocation2 + $0x358] sm:$0xff] 0.0
          %414 = vst [vmem:[#allocation2 + $0x360] sm:$0xff] 0.0
          %415 = vst [vmem:[#allocation2 + $0x368] sm:$0xff] 0.0
          %416 = vst [vmem:[#allocation2 + $0x370] sm:$0xff] 0.0
          %417 = vst [vmem:[#allocation2 + $0x378] sm:$0xff] 0.0
          %418 = vst [vmem:[#allocation2 + $0x380] sm:$0xff] 0.0
          %419 = vst [vmem:[#allocation2 + $0x388] sm:$0xff] 0.0
          %420 = vst [vmem:[#allocation2 + $0x390] sm:$0xff] 0.0
          %421 = vst [vmem:[#allocation2 + $0x398] sm:$0xff] 0.0
          %422 = vst [vmem:[#allocation2 + $0x3a0] sm:$0xff] 0.0
          %423 = vst [vmem:[#allocation2 + $0x3a8] sm:$0xff] 0.0
          %424 = vst [vmem:[#allocation2 + $0x3b0] sm:$0xff] 0.0
          %425 = vst [vmem:[#allocation2 + $0x3b8] sm:$0xff] 0.0
          %426 = vst [vmem:[#allocation2 + $0x3c0] sm:$0xff] 0.0
          %427 = vst [vmem:[#allocation2 + $0x3c8] sm:$0xff] 0.0
          %428 = vst [vmem:[#allocation2 + $0x3d0] sm:$0xff] 0.0
          %429 = vst [vmem:[#allocation2 + $0x3d8] sm:$0xff] 0.0
          %430 = vst [vmem:[#allocation2 + $0x3e0] sm:$0xff] 0.0
          %431 = vst [vmem:[#allocation2 + $0x3e8] sm:$0xff] 0.0
          %432 = vst [vmem:[#allocation2 + $0x3f0] sm:$0xff] 0.0
          %433 = vst [vmem:[#allocation2 + $0x3f8] sm:$0xff] 0.0
        $region48: #{tpu_custom_call.1} parent=31 // pred_fallthru
          _
        %v434 = vld [vmem:[#allocation2] sm:$0xff]
        %v435 = vld [vmem:[#allocation2 + $0x8] sm:$0xff]
        %v436 = vld [vmem:[#allocation2 + $0x10] sm:$0xff]
        %v437 = vld [vmem:[#allocation2 + $0x18] sm:$0xff]
        %v438 = vld [vmem:[#allocation2 + $0x20] sm:$0xff]
        %v439 = vld [vmem:[#allocation2 + $0x28] sm:$0xff]
        %v440 = vld [vmem:[#allocation2 + $0x30] sm:$0xff]
        %v441 = vld [vmem:[#allocation2 + $0x38] sm:$0xff]
        %v442 = vld [vmem:[#allocation2 + $0x40] sm:$0xff]
        %v443 = vld [vmem:[#allocation2 + $0x48] sm:$0xff]
        %v444 = vld [vmem:[#allocation2 + $0x50] sm:$0xff]
        %v445 = vld [vmem:[#allocation2 + $0x58] sm:$0xff]
        %v446 = vld [vmem:[#allocation2 + $0x60] sm:$0xff]
        %v447 = vld [vmem:[#allocation2 + $0x68] sm:$0xff]
        %v448 = vld [vmem:[#allocation2 + $0x70] sm:$0xff]
        %v449 = vld [vmem:[#allocation2 + $0x78] sm:$0xff]
        %v450 = vld [vmem:[#allocation2 + $0x80] sm:$0xff]
        %v451 = vld [vmem:[#allocation2 + $0x88] sm:$0xff]
        %v452 = vld [vmem:[#allocation2 + $0x90] sm:$0xff]
        %v453 = vld [vmem:[#allocation2 + $0x98] sm:$0xff]
        %v454 = vld [vmem:[#allocation2 + $0xa0] sm:$0xff]
        %v455 = vld [vmem:[#allocation2 + $0xa8] sm:$0xff]
        %v456 = vld [vmem:[#allocation2 + $0xb0] sm:$0xff]
        %v457 = vld [vmem:[#allocation2 + $0xb8] sm:$0xff]
        %v458 = vld [vmem:[#allocation2 + $0xc0] sm:$0xff]
        %v459 = vld [vmem:[#allocation2 + $0xc8] sm:$0xff]
        %v460 = vld [vmem:[#allocation2 + $0xd0] sm:$0xff]
        %v461 = vld [vmem:[#allocation2 + $0xd8] sm:$0xff]
        %v462 = vld [vmem:[#allocation2 + $0xe0] sm:$0xff]
        %v463 = vld [vmem:[#allocation2 + $0xe8] sm:$0xff]
        %v464 = vld [vmem:[#allocation2 + $0xf0] sm:$0xff]
        %v465 = vld [vmem:[#allocation2 + $0xf8] sm:$0xff]
        %v466 = vld [vmem:[#allocation2 + $0x100] sm:$0xff]
        %v467 = vld [vmem:[#allocation2 + $0x108] sm:$0xff]
        %v468 = vld [vmem:[#allocation2 + $0x110] sm:$0xff]
        %v469 = vld [vmem:[#allocation2 + $0x118] sm:$0xff]
        %v470 = vld [vmem:[#allocation2 + $0x120] sm:$0xff]
        %v471 = vld [vmem:[#allocation2 + $0x128] sm:$0xff]
        %v472 = vld [vmem:[#allocation2 + $0x130] sm:$0xff]
        %v473 = vld [vmem:[#allocation2 + $0x138] sm:$0xff]
        %v474 = vld [vmem:[#allocation2 + $0x140] sm:$0xff]
        %v475 = vld [vmem:[#allocation2 + $0x148] sm:$0xff]
        %v476 = vld [vmem:[#allocation2 + $0x150] sm:$0xff]
        %v477 = vld [vmem:[#allocation2 + $0x158] sm:$0xff]
        %v478 = vld [vmem:[#allocation2 + $0x160] sm:$0xff]
        %v479 = vld [vmem:[#allocation2 + $0x168] sm:$0xff]
        %v480 = vld [vmem:[#allocation2 + $0x170] sm:$0xff]
        %v481 = vld [vmem:[#allocation2 + $0x178] sm:$0xff]
        %v482 = vld [vmem:[#allocation2 + $0x180] sm:$0xff]
        %v483 = vld [vmem:[#allocation2 + $0x188] sm:$0xff]
        %v484 = vld [vmem:[#allocation2 + $0x190] sm:$0xff]
        %v485 = vld [vmem:[#allocation2 + $0x198] sm:$0xff]
        %v486 = vld [vmem:[#allocation2 + $0x1a0] sm:$0xff]
        %v487 = vld [vmem:[#allocation2 + $0x1a8] sm:$0xff]
        %v488 = vld [vmem:[#allocation2 + $0x1b0] sm:$0xff]
        %v489 = vld [vmem:[#allocation2 + $0x1b8] sm:$0xff]
        %v490 = vld [vmem:[#allocation2 + $0x1c0] sm:$0xff]
        %v491 = vld [vmem:[#allocation2 + $0x1c8] sm:$0xff]
        %v492 = vld [vmem:[#allocation2 + $0x1d0] sm:$0xff]
        %v493 = vld [vmem:[#allocation2 + $0x1d8] sm:$0xff]
        %v494 = vld [vmem:[#allocation2 + $0x1e0] sm:$0xff]
        %v495 = vld [vmem:[#allocation2 + $0x1e8] sm:$0xff]
        %v496 = vld [vmem:[#allocation2 + $0x1f0] sm:$0xff]
        %v497 = vld [vmem:[#allocation2 + $0x1f8] sm:$0xff]
        %v498 = vld [vmem:[#allocation2 + $0x200] sm:$0xff]
        %v499 = vld [vmem:[#allocation2 + $0x208] sm:$0xff]
        %v500 = vld [vmem:[#allocation2 + $0x210] sm:$0xff]
        %v501 = vld [vmem:[#allocation2 + $0x218] sm:$0xff]
        %v502 = vld [vmem:[#allocation2 + $0x220] sm:$0xff]
        %v503 = vld [vmem:[#allocation2 + $0x228] sm:$0xff]
        %v504 = vld [vmem:[#allocation2 + $0x230] sm:$0xff]
        %v505 = vld [vmem:[#allocation2 + $0x238] sm:$0xff]
        %v506 = vld [vmem:[#allocation2 + $0x240] sm:$0xff]
        %v507 = vld [vmem:[#allocation2 + $0x248] sm:$0xff]
        %v508 = vld [vmem:[#allocation2 + $0x250] sm:$0xff]
        %v509 = vld [vmem:[#allocation2 + $0x258] sm:$0xff]
        %v510 = vld [vmem:[#allocation2 + $0x260] sm:$0xff]
        %v511 = vld [vmem:[#allocation2 + $0x268] sm:$0xff]
        %v512 = vld [vmem:[#allocation2 + $0x270] sm:$0xff]
        %v513 = vld [vmem:[#allocation2 + $0x278] sm:$0xff]
        %v514 = vld [vmem:[#allocation2 + $0x280] sm:$0xff]
        %v515 = vld [vmem:[#allocation2 + $0x288] sm:$0xff]
        %v516 = vld [vmem:[#allocation2 + $0x290] sm:$0xff]
        %v517 = vld [vmem:[#allocation2 + $0x298] sm:$0xff]
        %v518 = vld [vmem:[#allocation2 + $0x2a0] sm:$0xff]
        %v519 = vld [vmem:[#allocation2 + $0x2a8] sm:$0xff]
        %v520 = vld [vmem:[#allocation2 + $0x2b0] sm:$0xff]
        %v521 = vld [vmem:[#allocation2 + $0x2b8] sm:$0xff]
        %v522 = vld [vmem:[#allocation2 + $0x2c0] sm:$0xff]
        %v523 = vld [vmem:[#allocation2 + $0x2c8] sm:$0xff]
        %v524 = vld [vmem:[#allocation2 + $0x2d0] sm:$0xff]
        %v525 = vld [vmem:[#allocation2 + $0x2d8] sm:$0xff]
        %v526 = vld [vmem:[#allocation2 + $0x2e0] sm:$0xff]
        %v527 = vld [vmem:[#allocation2 + $0x2e8] sm:$0xff]
        %v528 = vld [vmem:[#allocation2 + $0x2f0] sm:$0xff]
        %v529 = vld [vmem:[#allocation2 + $0x2f8] sm:$0xff]
        %v530 = vld [vmem:[#allocation2 + $0x300] sm:$0xff]
        %v531 = vld [vmem:[#allocation2 + $0x308] sm:$0xff]
        %v532 = vld [vmem:[#allocation2 + $0x310] sm:$0xff]
        %v533 = vld [vmem:[#allocation2 + $0x318] sm:$0xff]
        %v534 = vld [vmem:[#allocation2 + $0x320] sm:$0xff]
        %v535 = vld [vmem:[#allocation2 + $0x328] sm:$0xff]
        %v536 = vld [vmem:[#allocation2 + $0x330] sm:$0xff]
        %v537 = vld [vmem:[#allocation2 + $0x338] sm:$0xff]
        %v538 = vld [vmem:[#allocation2 + $0x340] sm:$0xff]
        %v539 = vld [vmem:[#allocation2 + $0x348] sm:$0xff]
        %v540 = vld [vmem:[#allocation2 + $0x350] sm:$0xff]
        %v541 = vld [vmem:[#allocation2 + $0x358] sm:$0xff]
        %v542 = vld [vmem:[#allocation2 + $0x360] sm:$0xff]
        %v543 = vld [vmem:[#allocation2 + $0x368] sm:$0xff]
        %v544 = vld [vmem:[#allocation2 + $0x370] sm:$0xff]
        %v545 = vld [vmem:[#allocation2 + $0x378] sm:$0xff]
        %v546 = vld [vmem:[#allocation2 + $0x380] sm:$0xff]
        %v547 = vld [vmem:[#allocation2 + $0x388] sm:$0xff]
        %v548 = vld [vmem:[#allocation2 + $0x390] sm:$0xff]
        %v549 = vld [vmem:[#allocation2 + $0x398] sm:$0xff]
        %v550 = vld [vmem:[#allocation2 + $0x3a0] sm:$0xff]
        %v551 = vld [vmem:[#allocation2 + $0x3a8] sm:$0xff]
        %v552 = vld [vmem:[#allocation2 + $0x3b0] sm:$0xff]
        %v553 = vld [vmem:[#allocation2 + $0x3b8] sm:$0xff]
        %v554 = vld [vmem:[#allocation2 + $0x3c0] sm:$0xff]
        %v555 = vld [vmem:[#allocation2 + $0x3c8] sm:$0xff]
        %v556 = vld [vmem:[#allocation2 + $0x3d0] sm:$0xff]
        %v557 = vld [vmem:[#allocation2 + $0x3d8] sm:$0xff]
        %v558 = vld [vmem:[#allocation2 + $0x3e0] sm:$0xff]
        %v559 = vld [vmem:[#allocation2 + $0x3e8] sm:$0xff]
        %v560 = vld [vmem:[#allocation2 + $0x3f0] sm:$0xff]
        %v561 = vld [vmem:[#allocation2 + $0x3f8] sm:$0xff]
        %v562 = vld [vmem:[%s244] sm:$0xff]
        %v563 = vld [vmem:[%s244 + $0x8] sm:$0xff]
        %v564 = vld [vmem:[%s244 + $0x10] sm:$0xff]
        %v565 = vld [vmem:[%s244 + $0x18] sm:$0xff]
        %v566 = vld [vmem:[%s244 + $0x20] sm:$0xff]
        %v567 = vld [vmem:[%s244 + $0x28] sm:$0xff]
        %v568 = vld [vmem:[%s244 + $0x30] sm:$0xff]
        %v569 = vld [vmem:[%s244 + $0x38] sm:$0xff]
        %v570 = vld [vmem:[%s244 + $0x40] sm:$0xff]
        %v571 = vld [vmem:[%s244 + $0x48] sm:$0xff]
        %v572 = vld [vmem:[%s244 + $0x50] sm:$0xff]
        %v573 = vld [vmem:[%s244 + $0x58] sm:$0xff]
        %v574 = vld [vmem:[%s244 + $0x60] sm:$0xff]
        %v575 = vld [vmem:[%s244 + $0x68] sm:$0xff]
        %v576 = vld [vmem:[%s244 + $0x70] sm:$0xff]
        %v577 = vld [vmem:[%s244 + $0x78] sm:$0xff]
        %v578 = vld [vmem:[%s244 + $0x80] sm:$0xff]
        %v579 = vld [vmem:[%s244 + $0x88] sm:$0xff]
        %v580 = vld [vmem:[%s244 + $0x90] sm:$0xff]
        %v581 = vld [vmem:[%s244 + $0x98] sm:$0xff]
        %v582 = vld [vmem:[%s244 + $0xa0] sm:$0xff]
        %v583 = vld [vmem:[%s244 + $0xa8] sm:$0xff]
        %v584 = vld [vmem:[%s244 + $0xb0] sm:$0xff]
        %v585 = vld [vmem:[%s244 + $0xb8] sm:$0xff]
        %v586 = vld [vmem:[%s244 + $0xc0] sm:$0xff]
        %v587 = vld [vmem:[%s244 + $0xc8] sm:$0xff]
        %v588 = vld [vmem:[%s244 + $0xd0] sm:$0xff]
        %v589 = vld [vmem:[%s244 + $0xd8] sm:$0xff]
        %v590 = vld [vmem:[%s244 + $0xe0] sm:$0xff]
        %v591 = vld [vmem:[%s244 + $0xe8] sm:$0xff]
        %v592 = vld [vmem:[%s244 + $0xf0] sm:$0xff]
        %v593 = vld [vmem:[%s244 + $0xf8] sm:$0xff]
        %v594 = vld [vmem:[%s244 + $0x100] sm:$0xff]
        %v595 = vld [vmem:[%s244 + $0x108] sm:$0xff]
        %v596 = vld [vmem:[%s244 + $0x110] sm:$0xff]
        %v597 = vld [vmem:[%s244 + $0x118] sm:$0xff]
        %v598 = vld [vmem:[%s244 + $0x120] sm:$0xff]
        %v599 = vld [vmem:[%s244 + $0x128] sm:$0xff]
        %v600 = vld [vmem:[%s244 + $0x130] sm:$0xff]
        %v601 = vld [vmem:[%s244 + $0x138] sm:$0xff]
        %v602 = vld [vmem:[%s244 + $0x140] sm:$0xff]
        %v603 = vld [vmem:[%s244 + $0x148] sm:$0xff]
        %v604 = vld [vmem:[%s244 + $0x150] sm:$0xff]
        %v605 = vld [vmem:[%s244 + $0x158] sm:$0xff]
        %v606 = vld [vmem:[%s244 + $0x160] sm:$0xff]
        %v607 = vld [vmem:[%s244 + $0x168] sm:$0xff]
        %v608 = vld [vmem:[%s244 + $0x170] sm:$0xff]
        %v609 = vld [vmem:[%s244 + $0x178] sm:$0xff]
        %v610 = vld [vmem:[%s244 + $0x180] sm:$0xff]
        %v611 = vld [vmem:[%s244 + $0x188] sm:$0xff]
        %v612 = vld [vmem:[%s244 + $0x190] sm:$0xff]
        %v613 = vld [vmem:[%s244 + $0x198] sm:$0xff]
        %v614 = vld [vmem:[%s244 + $0x1a0] sm:$0xff]
        %v615 = vld [vmem:[%s244 + $0x1a8] sm:$0xff]
        %v616 = vld [vmem:[%s244 + $0x1b0] sm:$0xff]
        %v617 = vld [vmem:[%s244 + $0x1b8] sm:$0xff]
        %v618 = vld [vmem:[%s244 + $0x1c0] sm:$0xff]
        %v619 = vld [vmem:[%s244 + $0x1c8] sm:$0xff]
        %v620 = vld [vmem:[%s244 + $0x1d0] sm:$0xff]
        %v621 = vld [vmem:[%s244 + $0x1d8] sm:$0xff]
        %v622 = vld [vmem:[%s244 + $0x1e0] sm:$0xff]
        %v623 = vld [vmem:[%s244 + $0x1e8] sm:$0xff]
        %v624 = vld [vmem:[%s244 + $0x1f0] sm:$0xff]
        %v625 = vld [vmem:[%s244 + $0x1f8] sm:$0xff]
        %v626 = vld [vmem:[%s253] sm:$0xff]
        %v627 = vld [vmem:[%s253 + $0x8] sm:$0xff]
        %v628 = vld [vmem:[%s253 + $0x10] sm:$0xff]
        %v629 = vld [vmem:[%s253 + $0x18] sm:$0xff]
        %v630 = vld [vmem:[%s253 + $0x20] sm:$0xff]
        %v631 = vld [vmem:[%s253 + $0x28] sm:$0xff]
        %v632 = vld [vmem:[%s253 + $0x30] sm:$0xff]
        %v633 = vld [vmem:[%s253 + $0x38] sm:$0xff]
        %v634 = vld [vmem:[%s253 + $0x40] sm:$0xff]
        %v635 = vld [vmem:[%s253 + $0x48] sm:$0xff]
        %v636 = vld [vmem:[%s253 + $0x50] sm:$0xff]
        %v637 = vld [vmem:[%s253 + $0x58] sm:$0xff]
        %v638 = vld [vmem:[%s253 + $0x60] sm:$0xff]
        %v639 = vld [vmem:[%s253 + $0x68] sm:$0xff]
        %v640 = vld [vmem:[%s253 + $0x70] sm:$0xff]
        %v641 = vld [vmem:[%s253 + $0x78] sm:$0xff]
        %v642 = vld [vmem:[%s253 + $0x80] sm:$0xff]
        %v643 = vld [vmem:[%s253 + $0x88] sm:$0xff]
        %v644 = vld [vmem:[%s253 + $0x90] sm:$0xff]
        %v645 = vld [vmem:[%s253 + $0x98] sm:$0xff]
        %v646 = vld [vmem:[%s253 + $0xa0] sm:$0xff]
        %v647 = vld [vmem:[%s253 + $0xa8] sm:$0xff]
        %v648 = vld [vmem:[%s253 + $0xb0] sm:$0xff]
        %v649 = vld [vmem:[%s253 + $0xb8] sm:$0xff]
        %v650 = vld [vmem:[%s253 + $0xc0] sm:$0xff]
        %v651 = vld [vmem:[%s253 + $0xc8] sm:$0xff]
        %v652 = vld [vmem:[%s253 + $0xd0] sm:$0xff]
        %v653 = vld [vmem:[%s253 + $0xd8] sm:$0xff]
        %v654 = vld [vmem:[%s253 + $0xe0] sm:$0xff]
        %v655 = vld [vmem:[%s253 + $0xe8] sm:$0xff]
        %v656 = vld [vmem:[%s253 + $0xf0] sm:$0xff]
        %v657 = vld [vmem:[%s253 + $0xf8] sm:$0xff]
        %v722 = vunpack.c.l.b16 %v562
        %v723 = vunpack.c.h.b16 %v562
        %v724 = vunpack.c.l.b16 %v563
        %v725 = vunpack.c.h.b16 %v563
        %v726 = vunpack.c.l.b16 %v564
        %v727 = vunpack.c.h.b16 %v564
        %v728 = vunpack.c.l.b16 %v565
        %v729 = vunpack.c.h.b16 %v565
        %v730 = vunpack.c.l.b16 %v566
        %v731 = vunpack.c.h.b16 %v566
        %v732 = vunpack.c.l.b16 %v567
        %v733 = vunpack.c.h.b16 %v567
        %v734 = vunpack.c.l.b16 %v568
        %v735 = vunpack.c.h.b16 %v568
        %v736 = vunpack.c.l.b16 %v569
        %v737 = vunpack.c.h.b16 %v569
        %v738 = vunpack.c.l.b16 %v570
        %v739 = vunpack.c.h.b16 %v570
        %v740 = vunpack.c.l.b16 %v571
        %v741 = vunpack.c.h.b16 %v571
        %v742 = vunpack.c.l.b16 %v572
        %v743 = vunpack.c.h.b16 %v572
        %v744 = vunpack.c.l.b16 %v573
        %v745 = vunpack.c.h.b16 %v573
        %v746 = vunpack.c.l.b16 %v574
        %v747 = vunpack.c.h.b16 %v574
        %v748 = vunpack.c.l.b16 %v575
        %v749 = vunpack.c.h.b16 %v575
        %v750 = vunpack.c.l.b16 %v576
        %v751 = vunpack.c.h.b16 %v576
        %v752 = vunpack.c.l.b16 %v577
        %v753 = vunpack.c.h.b16 %v577
        %v754 = vunpack.c.l.b16 %v578
        %v755 = vunpack.c.h.b16 %v578
        %v756 = vunpack.c.l.b16 %v579
        %v757 = vunpack.c.h.b16 %v579
        %v758 = vunpack.c.l.b16 %v580
        %v759 = vunpack.c.h.b16 %v580
        %v760 = vunpack.c.l.b16 %v581
        %v761 = vunpack.c.h.b16 %v581
        %v762 = vunpack.c.l.b16 %v582
        %v763 = vunpack.c.h.b16 %v582
        %v764 = vunpack.c.l.b16 %v583
        %v765 = vunpack.c.h.b16 %v583
        %v766 = vunpack.c.l.b16 %v584
        %v767 = vunpack.c.h.b16 %v584
        %v768 = vunpack.c.l.b16 %v585
        %v769 = vunpack.c.h.b16 %v585
        %v770 = vunpack.c.l.b16 %v586
        %v771 = vunpack.c.h.b16 %v586
        %v772 = vunpack.c.l.b16 %v587
        %v773 = vunpack.c.h.b16 %v587
        %v774 = vunpack.c.l.b16 %v588
        %v775 = vunpack.c.h.b16 %v588
        %v776 = vunpack.c.l.b16 %v589
        %v777 = vunpack.c.h.b16 %v589
        %v778 = vunpack.c.l.b16 %v590
        %v779 = vunpack.c.h.b16 %v590
        %v780 = vunpack.c.l.b16 %v591
        %v781 = vunpack.c.h.b16 %v591
        %v782 = vunpack.c.l.b16 %v592
        %v783 = vunpack.c.h.b16 %v592
        %v784 = vunpack.c.l.b16 %v593
        %v785 = vunpack.c.h.b16 %v593
        %v786 = vunpack.c.l.b16 %v594
        %v787 = vunpack.c.h.b16 %v594
        %v788 = vunpack.c.l.b16 %v595
        %v789 = vunpack.c.h.b16 %v595
        %v790 = vunpack.c.l.b16 %v596
        %v791 = vunpack.c.h.b16 %v596
        %v792 = vunpack.c.l.b16 %v597
        %v793 = vunpack.c.h.b16 %v597
        %v794 = vunpack.c.l.b16 %v598
        %v795 = vunpack.c.h.b16 %v598
        %v796 = vunpack.c.l.b16 %v599
        %v797 = vunpack.c.h.b16 %v599
        %v798 = vunpack.c.l.b16 %v600
        %v799 = vunpack.c.h.b16 %v600
        %v800 = vunpack.c.l.b16 %v601
        %v801 = vunpack.c.h.b16 %v601
        %v802 = vunpack.c.l.b16 %v602
        %v803 = vunpack.c.h.b16 %v602
        %v804 = vunpack.c.l.b16 %v603
        %v805 = vunpack.c.h.b16 %v603
        %v806 = vunpack.c.l.b16 %v604
        %v807 = vunpack.c.h.b16 %v604
        %v808 = vunpack.c.l.b16 %v605
        %v809 = vunpack.c.h.b16 %v605
        %v810 = vunpack.c.l.b16 %v606
        %v811 = vunpack.c.h.b16 %v606
        %v812 = vunpack.c.l.b16 %v607
        %v813 = vunpack.c.h.b16 %v607
        %v814 = vunpack.c.l.b16 %v608
        %v815 = vunpack.c.h.b16 %v608
        %v816 = vunpack.c.l.b16 %v609
        %v817 = vunpack.c.h.b16 %v609
        %v818 = vunpack.c.l.b16 %v610
        %v819 = vunpack.c.h.b16 %v610
        %v820 = vunpack.c.l.b16 %v611
        %v821 = vunpack.c.h.b16 %v611
        %v822 = vunpack.c.l.b16 %v612
        %v823 = vunpack.c.h.b16 %v612
        %v824 = vunpack.c.l.b16 %v613
        %v825 = vunpack.c.h.b16 %v613
        %v826 = vunpack.c.l.b16 %v614
        %v827 = vunpack.c.h.b16 %v614
        %v828 = vunpack.c.l.b16 %v615
        %v829 = vunpack.c.h.b16 %v615
        %v830 = vunpack.c.l.b16 %v616
        %v831 = vunpack.c.h.b16 %v616
        %v832 = vunpack.c.l.b16 %v617
        %v833 = vunpack.c.h.b16 %v617
        %v834 = vunpack.c.l.b16 %v618
        %v835 = vunpack.c.h.b16 %v618
        %v836 = vunpack.c.l.b16 %v619
        %v837 = vunpack.c.h.b16 %v619
        %v838 = vunpack.c.l.b16 %v620
        %v839 = vunpack.c.h.b16 %v620
        %v840 = vunpack.c.l.b16 %v621
        %v841 = vunpack.c.h.b16 %v621
        %v842 = vunpack.c.l.b16 %v622
        %v843 = vunpack.c.h.b16 %v622
        %v844 = vunpack.c.l.b16 %v623
        %v845 = vunpack.c.h.b16 %v623
        %v846 = vunpack.c.l.b16 %v624
        %v847 = vunpack.c.h.b16 %v624
        %v848 = vunpack.c.l.b16 %v625
        %v849 = vunpack.c.h.b16 %v625
        %v850 = vpack.c.b16 %v724, %v722
        %v851 = vpack.c.b16 %v725, %v723
        %v852 = vpack.c.b16 %v728, %v726
        %v853 = vpack.c.b16 %v729, %v727
        %v854 = vpack.c.b16 %v732, %v730
        %v855 = vpack.c.b16 %v733, %v731
        %v856 = vpack.c.b16 %v736, %v734
        %v857 = vpack.c.b16 %v737, %v735
        %v858 = vpack.c.b16 %v740, %v738
        %v859 = vpack.c.b16 %v741, %v739
        %v860 = vpack.c.b16 %v744, %v742
        %v861 = vpack.c.b16 %v745, %v743
        %v862 = vpack.c.b16 %v748, %v746
        %v863 = vpack.c.b16 %v749, %v747
        %v864 = vpack.c.b16 %v752, %v750
        %v865 = vpack.c.b16 %v753, %v751
        %v866 = vpack.c.b16 %v756, %v754
        %v867 = vpack.c.b16 %v757, %v755
        %v868 = vpack.c.b16 %v760, %v758
        %v869 = vpack.c.b16 %v761, %v759
        %v870 = vpack.c.b16 %v764, %v762
        %v871 = vpack.c.b16 %v765, %v763
        %v872 = vpack.c.b16 %v768, %v766
        %v873 = vpack.c.b16 %v769, %v767
        %v874 = vpack.c.b16 %v772, %v770
        %v875 = vpack.c.b16 %v773, %v771
        %v876 = vpack.c.b16 %v776, %v774
        %v877 = vpack.c.b16 %v777, %v775
        %v878 = vpack.c.b16 %v780, %v778
        %v879 = vpack.c.b16 %v781, %v779
        %v880 = vpack.c.b16 %v784, %v782
        %v881 = vpack.c.b16 %v785, %v783
        %v882 = vpack.c.b16 %v788, %v786
        %v883 = vpack.c.b16 %v789, %v787
        %v884 = vpack.c.b16 %v792, %v790
        %v885 = vpack.c.b16 %v793, %v791
        %v886 = vpack.c.b16 %v796, %v794
        %v887 = vpack.c.b16 %v797, %v795
        %v888 = vpack.c.b16 %v800, %v798
        %v889 = vpack.c.b16 %v801, %v799
        %v890 = vpack.c.b16 %v804, %v802
        %v891 = vpack.c.b16 %v805, %v803
        %v892 = vpack.c.b16 %v808, %v806
        %v893 = vpack.c.b16 %v809, %v807
        %v894 = vpack.c.b16 %v812, %v810
        %v895 = vpack.c.b16 %v813, %v811
        %v896 = vpack.c.b16 %v816, %v814
        %v897 = vpack.c.b16 %v817, %v815
        %v898 = vpack.c.b16 %v820, %v818
        %v899 = vpack.c.b16 %v821, %v819
        %v900 = vpack.c.b16 %v824, %v822
        %v901 = vpack.c.b16 %v825, %v823
        %v902 = vpack.c.b16 %v828, %v826
        %v903 = vpack.c.b16 %v829, %v827
        %v904 = vpack.c.b16 %v832, %v830
        %v905 = vpack.c.b16 %v833, %v831
        %v906 = vpack.c.b16 %v836, %v834
        %v907 = vpack.c.b16 %v837, %v835
        %v908 = vpack.c.b16 %v840, %v838
        %v909 = vpack.c.b16 %v841, %v839
        %v910 = vpack.c.b16 %v844, %v842
        %v911 = vpack.c.b16 %v845, %v843
        %v912 = vpack.c.b16 %v848, %v846
        %v913 = vpack.c.b16 %v849, %v847
        %v1010 = vunpack.c.l.b16 %v626
        %v1011 = vunpack.c.h.b16 %v626
        %v1012 = vunpack.c.l.b16 %v627
        %v1013 = vunpack.c.h.b16 %v627
        %v1014 = vunpack.c.l.b16 %v628
        %v1015 = vunpack.c.h.b16 %v628
        %v1016 = vunpack.c.l.b16 %v629
        %v1017 = vunpack.c.h.b16 %v629
        %v1018 = vunpack.c.l.b16 %v630
        %v1019 = vunpack.c.h.b16 %v630
        %v1020 = vunpack.c.l.b16 %v631
        %v1021 = vunpack.c.h.b16 %v631
        %v1022 = vunpack.c.l.b16 %v632
        %v1023 = vunpack.c.h.b16 %v632
        %v1024 = vunpack.c.l.b16 %v633
        %v1025 = vunpack.c.h.b16 %v633
        %v1026 = vunpack.c.l.b16 %v634
        %v1027 = vunpack.c.h.b16 %v634
        %v1028 = vunpack.c.l.b16 %v635
        %v1029 = vunpack.c.h.b16 %v635
        %v1030 = vunpack.c.l.b16 %v636
        %v1031 = vunpack.c.h.b16 %v636
        %v1032 = vunpack.c.l.b16 %v637
        %v1033 = vunpack.c.h.b16 %v637
        %v1034 = vunpack.c.l.b16 %v638
        %v1035 = vunpack.c.h.b16 %v638
        %v1036 = vunpack.c.l.b16 %v639
        %v1037 = vunpack.c.h.b16 %v639
        %v1038 = vunpack.c.l.b16 %v640
        %v1039 = vunpack.c.h.b16 %v640
        %v1040 = vunpack.c.l.b16 %v641
        %v1041 = vunpack.c.h.b16 %v641
        %v1042 = vunpack.c.l.b16 %v642
        %v1043 = vunpack.c.h.b16 %v642
        %v1044 = vunpack.c.l.b16 %v643
        %v1045 = vunpack.c.h.b16 %v643
        %v1046 = vunpack.c.l.b16 %v644
        %v1047 = vunpack.c.h.b16 %v644
        %v1048 = vunpack.c.l.b16 %v645
        %v1049 = vunpack.c.h.b16 %v645
        %v1050 = vunpack.c.l.b16 %v646
        %v1051 = vunpack.c.h.b16 %v646
        %v1052 = vunpack.c.l.b16 %v647
        %v1053 = vunpack.c.h.b16 %v647
        %v1054 = vunpack.c.l.b16 %v648
        %v1055 = vunpack.c.h.b16 %v648
        %v1056 = vunpack.c.l.b16 %v649
        %v1057 = vunpack.c.h.b16 %v649
        %v1058 = vunpack.c.l.b16 %v650
        %v1059 = vunpack.c.h.b16 %v650
        %v1060 = vunpack.c.l.b16 %v651
        %v1061 = vunpack.c.h.b16 %v651
        %v1062 = vunpack.c.l.b16 %v652
        %v1063 = vunpack.c.h.b16 %v652
        %v1064 = vunpack.c.l.b16 %v653
        %v1065 = vunpack.c.h.b16 %v653
        %v1066 = vunpack.c.l.b16 %v654
        %v1067 = vunpack.c.h.b16 %v654
        %v1068 = vunpack.c.l.b16 %v655
        %v1069 = vunpack.c.h.b16 %v655
        %v1070 = vunpack.c.l.b16 %v656
        %v1071 = vunpack.c.h.b16 %v656
        %v1072 = vunpack.c.l.b16 %v657
        %v1073 = vunpack.c.h.b16 %v657
        %v1074 = vpack.c.b16 %v1012, %v1010
        %v1075 = vpack.c.b16 %v1013, %v1011
        %v1076 = vpack.c.b16 %v1016, %v1014
        %v1077 = vpack.c.b16 %v1017, %v1015
        %v1078 = vpack.c.b16 %v1020, %v1018
        %v1079 = vpack.c.b16 %v1021, %v1019
        %v1080 = vpack.c.b16 %v1024, %v1022
        %v1081 = vpack.c.b16 %v1025, %v1023
        %v1082 = vpack.c.b16 %v1028, %v1026
        %v1083 = vpack.c.b16 %v1029, %v1027
        %v1084 = vpack.c.b16 %v1032, %v1030
        %v1085 = vpack.c.b16 %v1033, %v1031
        %v1086 = vpack.c.b16 %v1036, %v1034
        %v1087 = vpack.c.b16 %v1037, %v1035
        %v1088 = vpack.c.b16 %v1040, %v1038
        %v1089 = vpack.c.b16 %v1041, %v1039
        %v1090 = vpack.c.b16 %v1044, %v1042
        %v1091 = vpack.c.b16 %v1045, %v1043
        %v1092 = vpack.c.b16 %v1048, %v1046
        %v1093 = vpack.c.b16 %v1049, %v1047
        %v1094 = vpack.c.b16 %v1052, %v1050
        %v1095 = vpack.c.b16 %v1053, %v1051
        %v1096 = vpack.c.b16 %v1056, %v1054
        %v1097 = vpack.c.b16 %v1057, %v1055
        %v1098 = vpack.c.b16 %v1060, %v1058
        %v1099 = vpack.c.b16 %v1061, %v1059
        %v1100 = vpack.c.b16 %v1064, %v1062
        %v1101 = vpack.c.b16 %v1065, %v1063
        %v1102 = vpack.c.b16 %v1068, %v1066
        %v1103 = vpack.c.b16 %v1069, %v1067
        %v1104 = vpack.c.b16 %v1072, %v1070
        %v1105 = vpack.c.b16 %v1073, %v1071
        %1138 = vmatprep.subr.bf16.mxu0 %v1075
        %1139 = vmatpush1.bf16.msra.mxu0 %v1074
        %1140 = vmatprep.subr.bf16.mxu0 %v1077
        %1141 = vmatpush1.bf16.msra.mxu0 %v1076
        %1142 = vmatprep.subr.bf16.mxu0 %v1079
        %1143 = vmatpush1.bf16.msra.mxu0 %v1078
        %1144 = vmatprep.subr.bf16.mxu0 %v1081
        %1145 = vmatpush1.bf16.msra.mxu0 %v1080
        %1146 = vmatprep.subr.bf16.mxu0 %v1083
        %1147 = vmatpush1.bf16.msra.mxu0 %v1082
        %1148 = vmatprep.subr.bf16.mxu0 %v1085
        %1149 = vmatpush1.bf16.msra.mxu0 %v1084
        %1150 = vmatprep.subr.bf16.mxu0 %v1087
        %1151 = vmatpush1.bf16.msra.mxu0 %v1086
        %1152 = vmatprep.subr.bf16.mxu0 %v1089
        %1153 = vmatpush1.bf16.msra.mxu0 %v1088
        %1154 = vmatprep.subr.bf16.mxu0 %v1091
        %1155 = vmatpush1.bf16.msra.mxu0 %v1090
        %1156 = vmatprep.subr.bf16.mxu0 %v1093
        %1157 = vmatpush1.bf16.msra.mxu0 %v1092
        %1158 = vmatprep.subr.bf16.mxu0 %v1095
        %1159 = vmatpush1.bf16.msra.mxu0 %v1094
        %1160 = vmatprep.subr.bf16.mxu0 %v1097
        %1161 = vmatpush1.bf16.msra.mxu0 %v1096
        %1162 = vmatprep.subr.bf16.mxu0 %v1099
        %1163 = vmatpush1.bf16.msra.mxu0 %v1098
        %1164 = vmatprep.subr.bf16.mxu0 %v1101
        %1165 = vmatpush1.bf16.msra.mxu0 %v1100
        %1166 = vmatprep.subr.bf16.mxu0 %v1103
        %1167 = vmatpush1.bf16.msra.mxu0 %v1102
        %1168 = vmatprep.subr.bf16.mxu0 %v1105
        %1169 = vmatpush1.bf16.msra.mxu0 %v1104
        %1170 = vmatprep.mubr.bf16.mxu0 %v851
        %1171 = vmatmul.mubr.bf16.gmra.mrb[0].mxu0 %v850
        %v1172 = vpop.f32.mrb[0].mxu0
        %v1173 = vadd.f32 0.0, %v1172
        %v1174 = vpop.f32.mrb[0].mxu0
        %v1175 = vadd.f32 0.0, %v1174
        %v1176 = vpop.f32.mrb[0].mxu0
        %v1177 = vadd.f32 0.0, %v1176
        %v1178 = vpop.f32.mrb[0].mxu0
        %v1179 = vadd.f32 0.0, %v1178
        %1180 = vmatprep.mubr.bf16.mxu0 %v853
        %1181 = vmatmul.mubr.bf16.gmra.mrb[0].mxu0 %v852
        %v1182 = vpop.f32.mrb[0].mxu0
        %v1183 = vadd.f32 0.0, %v1182
        %v1184 = vpop.f32.mrb[0].mxu0
        %v1185 = vadd.f32 0.0, %v1184
        %v1186 = vpop.f32.mrb[0].mxu0
        %v1187 = vadd.f32 0.0, %v1186
        %v1188 = vpop.f32.mrb[0].mxu0
        %v1189 = vadd.f32 0.0, %v1188
        %1190 = vmatprep.mubr.bf16.mxu0 %v855
        %1191 = vmatmul.mubr.bf16.gmra.mrb[0].mxu0 %v854
        %v1192 = vpop.f32.mrb[0].mxu0
        %v1193 = vadd.f32 0.0, %v1192
        %v1194 = vpop.f32.mrb[0].mxu0
        %v1195 = vadd.f32 0.0, %v1194
        %v1196 = vpop.f32.mrb[0].mxu0
        %v1197 = vadd.f32 0.0, %v1196
        %v1198 = vpop.f32.mrb[0].mxu0
        %v1199 = vadd.f32 0.0, %v1198
        %1200 = vmatprep.mubr.bf16.mxu0 %v857
        %1201 = vmatmul.mubr.bf16.gmra.mrb[0].mxu0 %v856
        %v1202 = vpop.f32.mrb[0].mxu0
        %v1203 = vadd.f32 0.0, %v1202
        %v1204 = vpop.f32.mrb[0].mxu0
        %v1205 = vadd.f32 0.0, %v1204
        %v1206 = vpop.f32.mrb[0].mxu0
        %v1207 = vadd.f32 0.0, %v1206
        %v1208 = vpop.f32.mrb[0].mxu0
        %v1209 = vadd.f32 0.0, %v1208
        %1210 = vmatprep.mubr.bf16.mxu0 %v859
        %1211 = vmatmul.mubr.bf16.gmra.mrb[0].mxu0 %v858
        %v1212 = vpop.f32.mrb[0].mxu0
        %v1213 = vadd.f32 0.0, %v1212
        %v1214 = vpop.f32.mrb[0].mxu0
        %v1215 = vadd.f32 0.0, %v1214
        %v1216 = vpop.f32.mrb[0].mxu0
        %v1217 = vadd.f32 0.0, %v1216
        %v1218 = vpop.f32.mrb[0].mxu0
        %v1219 = vadd.f32 0.0, %v1218
        %1220 = vmatprep.mubr.bf16.mxu0 %v861
        %1221 = vmatmul.mubr.bf16.gmra.mrb[0].mxu0 %v860
        %v1222 = vpop.f32.mrb[0].mxu0
        %v1223 = vadd.f32 0.0, %v1222
        %v1224 = vpop.f32.mrb[0].mxu0
        %v1225 = vadd.f32 0.0, %v1224
        %v1226 = vpop.f32.mrb[0].mxu0
        %v1227 = vadd.f32 0.0, %v1226
        %v1228 = vpop.f32.mrb[0].mxu0
        %v1229 = vadd.f32 0.0, %v1228
        %1230 = vmatprep.mubr.bf16.mxu0 %v863
        %1231 = vmatmul.mubr.bf16.gmra.mrb[0].mxu0 %v862
        %v1232 = vpop.f32.mrb[0].mxu0
        %v1233 = vadd.f32 0.0, %v1232
        %v1234 = vpop.f32.mrb[0].mxu0
        %v1235 = vadd.f32 0.0, %v1234
        %v1236 = vpop.f32.mrb[0].mxu0
        %v1237 = vadd.f32 0.0, %v1236
        %v1238 = vpop.f32.mrb[0].mxu0
        %v1239 = vadd.f32 0.0, %v1238
        %1240 = vmatprep.mubr.bf16.mxu0 %v865
        %1241 = vmatmul.mubr.bf16.gmra.mrb[0].mxu0 %v864
        %v1242 = vpop.f32.mrb[0].mxu0
        %v1243 = vadd.f32 0.0, %v1242
        %v1244 = vpop.f32.mrb[0].mxu0
        %v1245 = vadd.f32 0.0, %v1244
        %v1246 = vpop.f32.mrb[0].mxu0
        %v1247 = vadd.f32 0.0, %v1246
        %v1248 = vpop.f32.mrb[0].mxu0
        %v1249 = vadd.f32 0.0, %v1248
        %1250 = vmatprep.mubr.bf16.mxu0 %v867
        %1251 = vmatmul.mubr.bf16.gmra.mrb[0].mxu0 %v866
        %v1252 = vpop.f32.mrb[0].mxu0
        %v1253 = vadd.f32 0.0, %v1252
        %v1254 = vpop.f32.mrb[0].mxu0
        %v1255 = vadd.f32 0.0, %v1254
        %v1256 = vpop.f32.mrb[0].mxu0
        %v1257 = vadd.f32 0.0, %v1256
        %v1258 = vpop.f32.mrb[0].mxu0
        %v1259 = vadd.f32 0.0, %v1258
        %1260 = vmatprep.mubr.bf16.mxu0 %v869
        %1261 = vmatmul.mubr.bf16.gmra.mrb[0].mxu0 %v868
        %v1262 = vpop.f32.mrb[0].mxu0
        %v1263 = vadd.f32 0.0, %v1262
        %v1264 = vpop.f32.mrb[0].mxu0
        %v1265 = vadd.f32 0.0, %v1264
        %v1266 = vpop.f32.mrb[0].mxu0
        %v1267 = vadd.f32 0.0, %v1266
        %v1268 = vpop.f32.mrb[0].mxu0
        %v1269 = vadd.f32 0.0, %v1268
        %1270 = vmatprep.mubr.bf16.mxu0 %v871
        %1271 = vmatmul.mubr.bf16.gmra.mrb[0].mxu0 %v870
        %v1272 = vpop.f32.mrb[0].mxu0
        %v1273 = vadd.f32 0.0, %v1272
        %v1274 = vpop.f32.mrb[0].mxu0
        %v1275 = vadd.f32 0.0, %v1274
        %v1276 = vpop.f32.mrb[0].mxu0
        %v1277 = vadd.f32 0.0, %v1276
        %v1278 = vpop.f32.mrb[0].mxu0
        %v1279 = vadd.f32 0.0, %v1278
        %1280 = vmatprep.mubr.bf16.mxu0 %v873
        %1281 = vmatmul.mubr.bf16.gmra.mrb[0].mxu0 %v872
        %v1282 = vpop.f32.mrb[0].mxu0
        %v1283 = vadd.f32 0.0, %v1282
        %v1284 = vpop.f32.mrb[0].mxu0
        %v1285 = vadd.f32 0.0, %v1284
        %v1286 = vpop.f32.mrb[0].mxu0
        %v1287 = vadd.f32 0.0, %v1286
        %v1288 = vpop.f32.mrb[0].mxu0
        %v1289 = vadd.f32 0.0, %v1288
        %1290 = vmatprep.mubr.bf16.mxu0 %v875
        %1291 = vmatmul.mubr.bf16.gmra.mrb[0].mxu0 %v874
        %v1292 = vpop.f32.mrb[0].mxu0
        %v1293 = vadd.f32 0.0, %v1292
        %v1294 = vpop.f32.mrb[0].mxu0
        %v1295 = vadd.f32 0.0, %v1294
        %v1296 = vpop.f32.mrb[0].mxu0
        %v1297 = vadd.f32 0.0, %v1296
        %v1298 = vpop.f32.mrb[0].mxu0
        %v1299 = vadd.f32 0.0, %v1298
        %1300 = vmatprep.mubr.bf16.mxu0 %v877
        %1301 = vmatmul.mubr.bf16.gmra.mrb[0].mxu0 %v876
        %v1302 = vpop.f32.mrb[0].mxu0
        %v1303 = vadd.f32 0.0, %v1302
        %v1304 = vpop.f32.mrb[0].mxu0
        %v1305 = vadd.f32 0.0, %v1304
        %v1306 = vpop.f32.mrb[0].mxu0
        %v1307 = vadd.f32 0.0, %v1306
        %v1308 = vpop.f32.mrb[0].mxu0
        %v1309 = vadd.f32 0.0, %v1308
        %1310 = vmatprep.mubr.bf16.mxu0 %v879
        %1311 = vmatmul.mubr.bf16.gmra.mrb[0].mxu0 %v878
        %v1312 = vpop.f32.mrb[0].mxu0
        %v1313 = vadd.f32 0.0, %v1312
        %v1314 = vpop.f32.mrb[0].mxu0
        %v1315 = vadd.f32 0.0, %v1314
        %v1316 = vpop.f32.mrb[0].mxu0
        %v1317 = vadd.f32 0.0, %v1316
        %v1318 = vpop.f32.mrb[0].mxu0
        %v1319 = vadd.f32 0.0, %v1318
        %1320 = vmatprep.mubr.bf16.mxu0 %v881
        %1321 = vmatmul.mubr.bf16.gmra.mrb[0].mxu0 %v880
        %v1322 = vpop.f32.mrb[0].mxu0
        %v1323 = vadd.f32 0.0, %v1322
        %v1324 = vpop.f32.mrb[0].mxu0
        %v1325 = vadd.f32 0.0, %v1324
        %v1326 = vpop.f32.mrb[0].mxu0
        %v1327 = vadd.f32 0.0, %v1326
        %v1328 = vpop.f32.mrb[0].mxu0
        %v1329 = vadd.f32 0.0, %v1328
        %1330 = vmatprep.mubr.bf16.mxu0 %v883
        %1331 = vmatmul.mubr.bf16.gmra.mrb[0].mxu0 %v882
        %v1332 = vpop.f32.mrb[0].mxu0
        %v1333 = vadd.f32 0.0, %v1332
        %v1334 = vpop.f32.mrb[0].mxu0
        %v1335 = vadd.f32 0.0, %v1334
        %v1336 = vpop.f32.mrb[0].mxu0
        %v1337 = vadd.f32 0.0, %v1336
        %v1338 = vpop.f32.mrb[0].mxu0
        %v1339 = vadd.f32 0.0, %v1338
        %1340 = vmatprep.mubr.bf16.mxu0 %v885
        %1341 = vmatmul.mubr.bf16.gmra.mrb[0].mxu0 %v884
        %v1342 = vpop.f32.mrb[0].mxu0
        %v1343 = vadd.f32 0.0, %v1342
        %v1344 = vpop.f32.mrb[0].mxu0
        %v1345 = vadd.f32 0.0, %v1344
        %v1346 = vpop.f32.mrb[0].mxu0
        %v1347 = vadd.f32 0.0, %v1346
        %v1348 = vpop.f32.mrb[0].mxu0
        %v1349 = vadd.f32 0.0, %v1348
        %1350 = vmatprep.mubr.bf16.mxu0 %v887
        %1351 = vmatmul.mubr.bf16.gmra.mrb[0].mxu0 %v886
        %v1352 = vpop.f32.mrb[0].mxu0
        %v1353 = vadd.f32 0.0, %v1352
        %v1354 = vpop.f32.mrb[0].mxu0
        %v1355 = vadd.f32 0.0, %v1354
        %v1356 = vpop.f32.mrb[0].mxu0
        %v1357 = vadd.f32 0.0, %v1356
        %v1358 = vpop.f32.mrb[0].mxu0
        %v1359 = vadd.f32 0.0, %v1358
        %1360 = vmatprep.mubr.bf16.mxu0 %v889
        %1361 = vmatmul.mubr.bf16.gmra.mrb[0].mxu0 %v888
        %v1362 = vpop.f32.mrb[0].mxu0
        %v1363 = vadd.f32 0.0, %v1362
        %v1364 = vpop.f32.mrb[0].mxu0
        %v1365 = vadd.f32 0.0, %v1364
        %v1366 = vpop.f32.mrb[0].mxu0
        %v1367 = vadd.f32 0.0, %v1366
        %v1368 = vpop.f32.mrb[0].mxu0
        %v1369 = vadd.f32 0.0, %v1368
        %1370 = vmatprep.mubr.bf16.mxu0 %v891
        %1371 = vmatmul.mubr.bf16.gmra.mrb[0].mxu0 %v890
        %v1372 = vpop.f32.mrb[0].mxu0
        %v1373 = vadd.f32 0.0, %v1372
        %v1374 = vpop.f32.mrb[0].mxu0
        %v1375 = vadd.f32 0.0, %v1374
        %v1376 = vpop.f32.mrb[0].mxu0
        %v1377 = vadd.f32 0.0, %v1376
        %v1378 = vpop.f32.mrb[0].mxu0
        %v1379 = vadd.f32 0.0, %v1378
        %1380 = vmatprep.mubr.bf16.mxu0 %v893
        %1381 = vmatmul.mubr.bf16.gmra.mrb[0].mxu0 %v892
        %v1382 = vpop.f32.mrb[0].mxu0
        %v1383 = vadd.f32 0.0, %v1382
        %v1384 = vpop.f32.mrb[0].mxu0
        %v1385 = vadd.f32 0.0, %v1384
        %v1386 = vpop.f32.mrb[0].mxu0
        %v1387 = vadd.f32 0.0, %v1386
        %v1388 = vpop.f32.mrb[0].mxu0
        %v1389 = vadd.f32 0.0, %v1388
        %1390 = vmatprep.mubr.bf16.mxu0 %v895
        %1391 = vmatmul.mubr.bf16.gmra.mrb[0].mxu0 %v894
        %v1392 = vpop.f32.mrb[0].mxu0
        %v1393 = vadd.f32 0.0, %v1392
        %v1394 = vpop.f32.mrb[0].mxu0
        %v1395 = vadd.f32 0.0, %v1394
        %v1396 = vpop.f32.mrb[0].mxu0
        %v1397 = vadd.f32 0.0, %v1396
        %v1398 = vpop.f32.mrb[0].mxu0
        %v1399 = vadd.f32 0.0, %v1398
        %1400 = vmatprep.mubr.bf16.mxu0 %v897
        %1401 = vmatmul.mubr.bf16.gmra.mrb[0].mxu0 %v896
        %v1402 = vpop.f32.mrb[0].mxu0
        %v1403 = vadd.f32 0.0, %v1402
        %v1404 = vpop.f32.mrb[0].mxu0
        %v1405 = vadd.f32 0.0, %v1404
        %v1406 = vpop.f32.mrb[0].mxu0
        %v1407 = vadd.f32 0.0, %v1406
        %v1408 = vpop.f32.mrb[0].mxu0
        %v1409 = vadd.f32 0.0, %v1408
        %1410 = vmatprep.mubr.bf16.mxu0 %v899
        %1411 = vmatmul.mubr.bf16.gmra.mrb[0].mxu0 %v898
        %v1412 = vpop.f32.mrb[0].mxu0
        %v1413 = vadd.f32 0.0, %v1412
        %v1414 = vpop.f32.mrb[0].mxu0
        %v1415 = vadd.f32 0.0, %v1414
        %v1416 = vpop.f32.mrb[0].mxu0
        %v1417 = vadd.f32 0.0, %v1416
        %v1418 = vpop.f32.mrb[0].mxu0
        %v1419 = vadd.f32 0.0, %v1418
        %1420 = vmatprep.mubr.bf16.mxu0 %v901
        %1421 = vmatmul.mubr.bf16.gmra.mrb[0].mxu0 %v900
        %v1422 = vpop.f32.mrb[0].mxu0
        %v1423 = vadd.f32 0.0, %v1422
        %v1424 = vpop.f32.mrb[0].mxu0
        %v1425 = vadd.f32 0.0, %v1424
        %v1426 = vpop.f32.mrb[0].mxu0
        %v1427 = vadd.f32 0.0, %v1426
        %v1428 = vpop.f32.mrb[0].mxu0
        %v1429 = vadd.f32 0.0, %v1428
        %1430 = vmatprep.mubr.bf16.mxu0 %v903
        %1431 = vmatmul.mubr.bf16.gmra.mrb[0].mxu0 %v902
        %v1432 = vpop.f32.mrb[0].mxu0
        %v1433 = vadd.f32 0.0, %v1432
        %v1434 = vpop.f32.mrb[0].mxu0
        %v1435 = vadd.f32 0.0, %v1434
        %v1436 = vpop.f32.mrb[0].mxu0
        %v1437 = vadd.f32 0.0, %v1436
        %v1438 = vpop.f32.mrb[0].mxu0
        %v1439 = vadd.f32 0.0, %v1438
        %1440 = vmatprep.mubr.bf16.mxu0 %v905
        %1441 = vmatmul.mubr.bf16.gmra.mrb[0].mxu0 %v904
        %v1442 = vpop.f32.mrb[0].mxu0
        %v1443 = vadd.f32 0.0, %v1442
        %v1444 = vpop.f32.mrb[0].mxu0
        %v1445 = vadd.f32 0.0, %v1444
        %v1446 = vpop.f32.mrb[0].mxu0
        %v1447 = vadd.f32 0.0, %v1446
        %v1448 = vpop.f32.mrb[0].mxu0
        %v1449 = vadd.f32 0.0, %v1448
        %1450 = vmatprep.mubr.bf16.mxu0 %v907
        %1451 = vmatmul.mubr.bf16.gmra.mrb[0].mxu0 %v906
        %v1452 = vpop.f32.mrb[0].mxu0
        %v1453 = vadd.f32 0.0, %v1452
        %v1454 = vpop.f32.mrb[0].mxu0
        %v1455 = vadd.f32 0.0, %v1454
        %v1456 = vpop.f32.mrb[0].mxu0
        %v1457 = vadd.f32 0.0, %v1456
        %v1458 = vpop.f32.mrb[0].mxu0
        %v1459 = vadd.f32 0.0, %v1458
        %1460 = vmatprep.mubr.bf16.mxu0 %v909
        %1461 = vmatmul.mubr.bf16.gmra.mrb[0].mxu0 %v908
        %v1462 = vpop.f32.mrb[0].mxu0
        %v1463 = vadd.f32 0.0, %v1462
        %v1464 = vpop.f32.mrb[0].mxu0
        %v1465 = vadd.f32 0.0, %v1464
        %v1466 = vpop.f32.mrb[0].mxu0
        %v1467 = vadd.f32 0.0, %v1466
        %v1468 = vpop.f32.mrb[0].mxu0
        %v1469 = vadd.f32 0.0, %v1468
        %1470 = vmatprep.mubr.bf16.mxu0 %v911
        %1471 = vmatmul.mubr.bf16.gmra.mrb[0].mxu0 %v910
        %v1472 = vpop.f32.mrb[0].mxu0
        %v1473 = vadd.f32 0.0, %v1472
        %v1474 = vpop.f32.mrb[0].mxu0
        %v1475 = vadd.f32 0.0, %v1474
        %v1476 = vpop.f32.mrb[0].mxu0
        %v1477 = vadd.f32 0.0, %v1476
        %v1478 = vpop.f32.mrb[0].mxu0
        %v1479 = vadd.f32 0.0, %v1478
        %1480 = vmatprep.mubr.bf16.mxu0 %v913
        %1481 = vmatmul.mubr.bf16.gmra.mrb[0].mxu0 %v912
        %v1482 = vpop.f32.mrb[0].mxu0
        %v1483 = vadd.f32 0.0, %v1482
        %v1484 = vpop.f32.mrb[0].mxu0
        %v1485 = vadd.f32 0.0, %v1484
        %v1486 = vpop.f32.mrb[0].mxu0
        %v1487 = vadd.f32 0.0, %v1486
        %v1488 = vpop.f32.mrb[0].mxu0
        %v1489 = vadd.f32 0.0, %v1488
        %1490 = vdwg.mxu0
        %v1491 = vadd.f32 %v434, %v1173
        %v1492 = vadd.f32 %v435, %v1175
        %v1493 = vadd.f32 %v436, %v1177
        %v1494 = vadd.f32 %v437, %v1179
        %v1495 = vadd.f32 %v438, %v1183
        %v1496 = vadd.f32 %v439, %v1185
        %v1497 = vadd.f32 %v440, %v1187
        %v1498 = vadd.f32 %v441, %v1189
        %v1499 = vadd.f32 %v442, %v1193
        %v1500 = vadd.f32 %v443, %v1195
        %v1501 = vadd.f32 %v444, %v1197
        %v1502 = vadd.f32 %v445, %v1199
        %v1503 = vadd.f32 %v446, %v1203
        %v1504 = vadd.f32 %v447, %v1205
        %v1505 = vadd.f32 %v448, %v1207
        %v1506 = vadd.f32 %v449, %v1209
        %v1507 = vadd.f32 %v450, %v1213
        %v1508 = vadd.f32 %v451, %v1215
        %v1509 = vadd.f32 %v452, %v1217
        %v1510 = vadd.f32 %v453, %v1219
        %v1511 = vadd.f32 %v454, %v1223
        %v1512 = vadd.f32 %v455, %v1225
        %v1513 = vadd.f32 %v456, %v1227
        %v1514 = vadd.f32 %v457, %v1229
        %v1515 = vadd.f32 %v458, %v1233
        %v1516 = vadd.f32 %v459, %v1235
        %v1517 = vadd.f32 %v460, %v1237
        %v1518 = vadd.f32 %v461, %v1239
        %v1519 = vadd.f32 %v462, %v1243
        %v1520 = vadd.f32 %v463, %v1245
        %v1521 = vadd.f32 %v464, %v1247
        %v1522 = vadd.f32 %v465, %v1249
        %v1523 = vadd.f32 %v466, %v1253
        %v1524 = vadd.f32 %v467, %v1255
        %v1525 = vadd.f32 %v468, %v1257
        %v1526 = vadd.f32 %v469, %v1259
        %v1527 = vadd.f32 %v470, %v1263
        %v1528 = vadd.f32 %v471, %v1265
        %v1529 = vadd.f32 %v472, %v1267
        %v1530 = vadd.f32 %v473, %v1269
        %v1531 = vadd.f32 %v474, %v1273
        %v1532 = vadd.f32 %v475, %v1275
        %v1533 = vadd.f32 %v476, %v1277
        %v1534 = vadd.f32 %v477, %v1279
        %v1535 = vadd.f32 %v478, %v1283
        %v1536 = vadd.f32 %v479, %v1285
        %v1537 = vadd.f32 %v480, %v1287
        %v1538 = vadd.f32 %v481, %v1289
        %v1539 = vadd.f32 %v482, %v1293
        %v1540 = vadd.f32 %v483, %v1295
        %v1541 = vadd.f32 %v484, %v1297
        %v1542 = vadd.f32 %v485, %v1299
        %v1543 = vadd.f32 %v486, %v1303
        %v1544 = vadd.f32 %v487, %v1305
        %v1545 = vadd.f32 %v488, %v1307
        %v1546 = vadd.f32 %v489, %v1309
        %v1547 = vadd.f32 %v490, %v1313
        %v1548 = vadd.f32 %v491, %v1315
        %v1549 = vadd.f32 %v492, %v1317
        %v1550 = vadd.f32 %v493, %v1319
        %v1551 = vadd.f32 %v494, %v1323
        %v1552 = vadd.f32 %v495, %v1325
        %v1553 = vadd.f32 %v496, %v1327
        %v1554 = vadd.f32 %v497, %v1329
        %v1555 = vadd.f32 %v498, %v1333
        %v1556 = vadd.f32 %v499, %v1335
        %v1557 = vadd.f32 %v500, %v1337
        %v1558 = vadd.f32 %v501, %v1339
        %v1559 = vadd.f32 %v502, %v1343
        %v1560 = vadd.f32 %v503, %v1345
        %v1561 = vadd.f32 %v504, %v1347
        %v1562 = vadd.f32 %v505, %v1349
        %v1563 = vadd.f32 %v506, %v1353
        %v1564 = vadd.f32 %v507, %v1355
        %v1565 = vadd.f32 %v508, %v1357
        %v1566 = vadd.f32 %v509, %v1359
        %v1567 = vadd.f32 %v510, %v1363
        %v1568 = vadd.f32 %v511, %v1365
        %v1569 = vadd.f32 %v512, %v1367
        %v1570 = vadd.f32 %v513, %v1369
        %v1571 = vadd.f32 %v514, %v1373
        %v1572 = vadd.f32 %v515, %v1375
        %v1573 = vadd.f32 %v516, %v1377
        %v1574 = vadd.f32 %v517, %v1379
        %v1575 = vadd.f32 %v518, %v1383
        %v1576 = vadd.f32 %v519, %v1385
        %v1577 = vadd.f32 %v520, %v1387
        %v1578 = vadd.f32 %v521, %v1389
        %v1579 = vadd.f32 %v522, %v1393
        %v1580 = vadd.f32 %v523, %v1395
        %v1581 = vadd.f32 %v524, %v1397
        %v1582 = vadd.f32 %v525, %v1399
        %v1583 = vadd.f32 %v526, %v1403
        %v1584 = vadd.f32 %v527, %v1405
        %v1585 = vadd.f32 %v528, %v1407
        %v1586 = vadd.f32 %v529, %v1409
        %v1587 = vadd.f32 %v530, %v1413
        %v1588 = vadd.f32 %v531, %v1415
        %v1589 = vadd.f32 %v532, %v1417
        %v1590 = vadd.f32 %v533, %v1419
        %v1591 = vadd.f32 %v534, %v1423
        %v1592 = vadd.f32 %v535, %v1425
        %v1593 = vadd.f32 %v536, %v1427
        %v1594 = vadd.f32 %v537, %v1429
        %v1595 = vadd.f32 %v538, %v1433
        %v1596 = vadd.f32 %v539, %v1435
        %v1597 = vadd.f32 %v540, %v1437
        %v1598 = vadd.f32 %v541, %v1439
        %v1599 = vadd.f32 %v542, %v1443
        %v1600 = vadd.f32 %v543, %v1445
        %v1601 = vadd.f32 %v544, %v1447
        %v1602 = vadd.f32 %v545, %v1449
        %v1603 = vadd.f32 %v546, %v1453
        %v1604 = vadd.f32 %v547, %v1455
        %v1605 = vadd.f32 %v548, %v1457
        %v1606 = vadd.f32 %v549, %v1459
        %v1607 = vadd.f32 %v550, %v1463
        %v1608 = vadd.f32 %v551, %v1465
        %v1609 = vadd.f32 %v552, %v1467
        %v1610 = vadd.f32 %v553, %v1469
        %v1611 = vadd.f32 %v554, %v1473
        %v1612 = vadd.f32 %v555, %v1475
        %v1613 = vadd.f32 %v556, %v1477
        %v1614 = vadd.f32 %v557, %v1479
        %v1615 = vadd.f32 %v558, %v1483
        %v1616 = vadd.f32 %v559, %v1485
        %v1617 = vadd.f32 %v560, %v1487
        %v1618 = vadd.f32 %v561, %v1489
        %1619 = vst [vmem:[#allocation2] sm:$0xff] %v1491
        %1620 = vst [vmem:[#allocation2 + $0x8] sm:$0xff] %v1492
        %1621 = vst [vmem:[#allocation2 + $0x10] sm:$0xff] %v1493
        %1622 = vst [vmem:[#allocation2 + $0x18] sm:$0xff] %v1494
        %1623 = vst [vmem:[#allocation2 + $0x20] sm:$0xff] %v1495
        %1624 = vst [vmem:[#allocation2 + $0x28] sm:$0xff] %v1496
        %1625 = vst [vmem:[#allocation2 + $0x30] sm:$0xff] %v1497
        %1626 = vst [vmem:[#allocation2 + $0x38] sm:$0xff] %v1498
        %1627 = vst [vmem:[#allocation2 + $0x40] sm:$0xff] %v1499
        %1628 = vst [vmem:[#allocation2 + $0x48] sm:$0xff] %v1500
        %1629 = vst [vmem:[#allocation2 + $0x50] sm:$0xff] %v1501
        %1630 = vst [vmem:[#allocation2 + $0x58] sm:$0xff] %v1502
        %1631 = vst [vmem:[#allocation2 + $0x60] sm:$0xff] %v1503
        %1632 = vst [vmem:[#allocation2 + $0x68] sm:$0xff] %v1504
        %1633 = vst [vmem:[#allocation2 + $0x70] sm:$0xff] %v1505
        %1634 = vst [vmem:[#allocation2 + $0x78] sm:$0xff] %v1506
        %1635 = vst [vmem:[#allocation2 + $0x80] sm:$0xff] %v1507
        %1636 = vst [vmem:[#allocation2 + $0x88] sm:$0xff] %v1508
        %1637 = vst [vmem:[#allocation2 + $0x90] sm:$0xff] %v1509
        %1638 = vst [vmem:[#allocation2 + $0x98] sm:$0xff] %v1510
        %1639 = vst [vmem:[#allocation2 + $0xa0] sm:$0xff] %v1511
        %1640 = vst [vmem:[#allocation2 + $0xa8] sm:$0xff] %v1512
        %1641 = vst [vmem:[#allocation2 + $0xb0] sm:$0xff] %v1513
        %1642 = vst [vmem:[#allocation2 + $0xb8] sm:$0xff] %v1514
        %1643 = vst [vmem:[#allocation2 + $0xc0] sm:$0xff] %v1515
        %1644 = vst [vmem:[#allocation2 + $0xc8] sm:$0xff] %v1516
        %1645 = vst [vmem:[#allocation2 + $0xd0] sm:$0xff] %v1517
        %1646 = vst [vmem:[#allocation2 + $0xd8] sm:$0xff] %v1518
        %1647 = vst [vmem:[#allocation2 + $0xe0] sm:$0xff] %v1519
        %1648 = vst [vmem:[#allocation2 + $0xe8] sm:$0xff] %v1520
        %1649 = vst [vmem:[#allocation2 + $0xf0] sm:$0xff] %v1521
        %1650 = vst [vmem:[#allocation2 + $0xf8] sm:$0xff] %v1522
        %1651 = vst [vmem:[#allocation2 + $0x100] sm:$0xff] %v1523
        %1652 = vst [vmem:[#allocation2 + $0x108] sm:$0xff] %v1524
        %1653 = vst [vmem:[#allocation2 + $0x110] sm:$0xff] %v1525
        %1654 = vst [vmem:[#allocation2 + $0x118] sm:$0xff] %v1526
        %1655 = vst [vmem:[#allocation2 + $0x120] sm:$0xff] %v1527
        %1656 = vst [vmem:[#allocation2 + $0x128] sm:$0xff] %v1528
        %1657 = vst [vmem:[#allocation2 + $0x130] sm:$0xff] %v1529
        %1658 = vst [vmem:[#allocation2 + $0x138] sm:$0xff] %v1530
        %1659 = vst [vmem:[#allocation2 + $0x140] sm:$0xff] %v1531
        %1660 = vst [vmem:[#allocation2 + $0x148] sm:$0xff] %v1532
        %1661 = vst [vmem:[#allocation2 + $0x150] sm:$0xff] %v1533
        %1662 = vst [vmem:[#allocation2 + $0x158] sm:$0xff] %v1534
        %1663 = vst [vmem:[#allocation2 + $0x160] sm:$0xff] %v1535
        %1664 = vst [vmem:[#allocation2 + $0x168] sm:$0xff] %v1536
        %1665 = vst [vmem:[#allocation2 + $0x170] sm:$0xff] %v1537
        %1666 = vst [vmem:[#allocation2 + $0x178] sm:$0xff] %v1538
        %1667 = vst [vmem:[#allocation2 + $0x180] sm:$0xff] %v1539
        %1668 = vst [vmem:[#allocation2 + $0x188] sm:$0xff] %v1540
        %1669 = vst [vmem:[#allocation2 + $0x190] sm:$0xff] %v1541
        %1670 = vst [vmem:[#allocation2 + $0x198] sm:$0xff] %v1542
        %1671 = vst [vmem:[#allocation2 + $0x1a0] sm:$0xff] %v1543
        %1672 = vst [vmem:[#allocation2 + $0x1a8] sm:$0xff] %v1544
        %1673 = vst [vmem:[#allocation2 + $0x1b0] sm:$0xff] %v1545
        %1674 = vst [vmem:[#allocation2 + $0x1b8] sm:$0xff] %v1546
        %1675 = vst [vmem:[#allocation2 + $0x1c0] sm:$0xff] %v1547
        %1676 = vst [vmem:[#allocation2 + $0x1c8] sm:$0xff] %v1548
        %1677 = vst [vmem:[#allocation2 + $0x1d0] sm:$0xff] %v1549
        %1678 = vst [vmem:[#allocation2 + $0x1d8] sm:$0xff] %v1550
        %1679 = vst [vmem:[#allocation2 + $0x1e0] sm:$0xff] %v1551
        %1680 = vst [vmem:[#allocation2 + $0x1e8] sm:$0xff] %v1552
        %1681 = vst [vmem:[#allocation2 + $0x1f0] sm:$0xff] %v1553
        %1682 = vst [vmem:[#allocation2 + $0x1f8] sm:$0xff] %v1554
        %1683 = vst [vmem:[#allocation2 + $0x200] sm:$0xff] %v1555
        %1684 = vst [vmem:[#allocation2 + $0x208] sm:$0xff] %v1556
        %1685 = vst [vmem:[#allocation2 + $0x210] sm:$0xff] %v1557
        %1686 = vst [vmem:[#allocation2 + $0x218] sm:$0xff] %v1558
        %1687 = vst [vmem:[#allocation2 + $0x220] sm:$0xff] %v1559
        %1688 = vst [vmem:[#allocation2 + $0x228] sm:$0xff] %v1560
        %1689 = vst [vmem:[#allocation2 + $0x230] sm:$0xff] %v1561
        %1690 = vst [vmem:[#allocation2 + $0x238] sm:$0xff] %v1562
        %1691 = vst [vmem:[#allocation2 + $0x240] sm:$0xff] %v1563
        %1692 = vst [vmem:[#allocation2 + $0x248] sm:$0xff] %v1564
        %1693 = vst [vmem:[#allocation2 + $0x250] sm:$0xff] %v1565
        %1694 = vst [vmem:[#allocation2 + $0x258] sm:$0xff] %v1566
        %1695 = vst [vmem:[#allocation2 + $0x260] sm:$0xff] %v1567
        %1696 = vst [vmem:[#allocation2 + $0x268] sm:$0xff] %v1568
        %1697 = vst [vmem:[#allocation2 + $0x270] sm:$0xff] %v1569
        %1698 = vst [vmem:[#allocation2 + $0x278] sm:$0xff] %v1570
        %1699 = vst [vmem:[#allocation2 + $0x280] sm:$0xff] %v1571
        %1700 = vst [vmem:[#allocation2 + $0x288] sm:$0xff] %v1572
        %1701 = vst [vmem:[#allocation2 + $0x290] sm:$0xff] %v1573
        %1702 = vst [vmem:[#allocation2 + $0x298] sm:$0xff] %v1574
        %1703 = vst [vmem:[#allocation2 + $0x2a0] sm:$0xff] %v1575
        %1704 = vst [vmem:[#allocation2 + $0x2a8] sm:$0xff] %v1576
        %1705 = vst [vmem:[#allocation2 + $0x2b0] sm:$0xff] %v1577
        %1706 = vst [vmem:[#allocation2 + $0x2b8] sm:$0xff] %v1578
        %1707 = vst [vmem:[#allocation2 + $0x2c0] sm:$0xff] %v1579
        %1708 = vst [vmem:[#allocation2 + $0x2c8] sm:$0xff] %v1580
        %1709 = vst [vmem:[#allocation2 + $0x2d0] sm:$0xff] %v1581
        %1710 = vst [vmem:[#allocation2 + $0x2d8] sm:$0xff] %v1582
        %1711 = vst [vmem:[#allocation2 + $0x2e0] sm:$0xff] %v1583
        %1712 = vst [vmem:[#allocation2 + $0x2e8] sm:$0xff] %v1584
        %1713 = vst [vmem:[#allocation2 + $0x2f0] sm:$0xff] %v1585
        %1714 = vst [vmem:[#allocation2 + $0x2f8] sm:$0xff] %v1586
        %1715 = vst [vmem:[#allocation2 + $0x300] sm:$0xff] %v1587
        %1716 = vst [vmem:[#allocation2 + $0x308] sm:$0xff] %v1588
        %1717 = vst [vmem:[#allocation2 + $0x310] sm:$0xff] %v1589
        %1718 = vst [vmem:[#allocation2 + $0x318] sm:$0xff] %v1590
        %1719 = vst [vmem:[#allocation2 + $0x320] sm:$0xff] %v1591
        %1720 = vst [vmem:[#allocation2 + $0x328] sm:$0xff] %v1592
        %1721 = vst [vmem:[#allocation2 + $0x330] sm:$0xff] %v1593
        %1722 = vst [vmem:[#allocation2 + $0x338] sm:$0xff] %v1594
        %1723 = vst [vmem:[#allocation2 + $0x340] sm:$0xff] %v1595
        %1724 = vst [vmem:[#allocation2 + $0x348] sm:$0xff] %v1596
        %1725 = vst [vmem:[#allocation2 + $0x350] sm:$0xff] %v1597
        %1726 = vst [vmem:[#allocation2 + $0x358] sm:$0xff] %v1598
        %1727 = vst [vmem:[#allocation2 + $0x360] sm:$0xff] %v1599
        %1728 = vst [vmem:[#allocation2 + $0x368] sm:$0xff] %v1600
        %1729 = vst [vmem:[#allocation2 + $0x370] sm:$0xff] %v1601
        %1730 = vst [vmem:[#allocation2 + $0x378] sm:$0xff] %v1602
        %1731 = vst [vmem:[#allocation2 + $0x380] sm:$0xff] %v1603
        %1732 = vst [vmem:[#allocation2 + $0x388] sm:$0xff] %v1604
        %1733 = vst [vmem:[#allocation2 + $0x390] sm:$0xff] %v1605
        %1734 = vst [vmem:[#allocation2 + $0x398] sm:$0xff] %v1606
        %1735 = vst [vmem:[#allocation2 + $0x3a0] sm:$0xff] %v1607
        %1736 = vst [vmem:[#allocation2 + $0x3a8] sm:$0xff] %v1608
        %1737 = vst [vmem:[#allocation2 + $0x3b0] sm:$0xff] %v1609
        %1738 = vst [vmem:[#allocation2 + $0x3b8] sm:$0xff] %v1610
        %1739 = vst [vmem:[#allocation2 + $0x3c0] sm:$0xff] %v1611
        %1740 = vst [vmem:[#allocation2 + $0x3c8] sm:$0xff] %v1612
        %1741 = vst [vmem:[#allocation2 + $0x3d0] sm:$0xff] %v1613
        %1742 = vst [vmem:[#allocation2 + $0x3d8] sm:$0xff] %v1614
        %1743 = vst [vmem:[#allocation2 + $0x3e0] sm:$0xff] %v1615
        %1744 = vst [vmem:[#allocation2 + $0x3e8] sm:$0xff] %v1616
        %1745 = vst [vmem:[#allocation2 + $0x3f0] sm:$0xff] %v1617
        %1746 = vst [vmem:[#allocation2 + $0x3f8] sm:$0xff] %v1618
        // Predicated region
        $region49: #{tpu_custom_call.1} parent=31 // pred_check
          %p1747 = pneg %p302
        $region50: #{tpu_custom_call.1} parent=31 // pred_check_branch
          %1749 = sbr.rel (%p1747) target = $region52
        $region51: #{tpu_custom_call.1} parent=31 // pred_region
          %v1750 = vld [vmem:[#allocation2] sm:$0xff]
          %v1751 = vld [vmem:[#allocation2 + $0x8] sm:$0xff]
          %v1752 = vld [vmem:[#allocation2 + $0x10] sm:$0xff]
          %v1753 = vld [vmem:[#allocation2 + $0x18] sm:$0xff]
          %v1754 = vld [vmem:[#allocation2 + $0x20] sm:$0xff]
          %v1755 = vld [vmem:[#allocation2 + $0x28] sm:$0xff]
          %v1756 = vld [vmem:[#allocation2 + $0x30] sm:$0xff]
          %v1757 = vld [vmem:[#allocation2 + $0x38] sm:$0xff]
          %v1758 = vld [vmem:[#allocation2 + $0x40] sm:$0xff]
          %v1759 = vld [vmem:[#allocation2 + $0x48] sm:$0xff]
          %v1760 = vld [vmem:[#allocation2 + $0x50] sm:$0xff]
          %v1761 = vld [vmem:[#allocation2 + $0x58] sm:$0xff]
          %v1762 = vld [vmem:[#allocation2 + $0x60] sm:$0xff]
          %v1763 = vld [vmem:[#allocation2 + $0x68] sm:$0xff]
          %v1764 = vld [vmem:[#allocation2 + $0x70] sm:$0xff]
          %v1765 = vld [vmem:[#allocation2 + $0x78] sm:$0xff]
          %v1766 = vld [vmem:[#allocation2 + $0x80] sm:$0xff]
          %v1767 = vld [vmem:[#allocation2 + $0x88] sm:$0xff]
          %v1768 = vld [vmem:[#allocation2 + $0x90] sm:$0xff]
          %v1769 = vld [vmem:[#allocation2 + $0x98] sm:$0xff]
          %v1770 = vld [vmem:[#allocation2 + $0xa0] sm:$0xff]
          %v1771 = vld [vmem:[#allocation2 + $0xa8] sm:$0xff]
          %v1772 = vld [vmem:[#allocation2 + $0xb0] sm:$0xff]
          %v1773 = vld [vmem:[#allocation2 + $0xb8] sm:$0xff]
          %v1774 = vld [vmem:[#allocation2 + $0xc0] sm:$0xff]
          %v1775 = vld [vmem:[#allocation2 + $0xc8] sm:$0xff]
          %v1776 = vld [vmem:[#allocation2 + $0xd0] sm:$0xff]
          %v1777 = vld [vmem:[#allocation2 + $0xd8] sm:$0xff]
          %v1778 = vld [vmem:[#allocation2 + $0xe0] sm:$0xff]
          %v1779 = vld [vmem:[#allocation2 + $0xe8] sm:$0xff]
          %v1780 = vld [vmem:[#allocation2 + $0xf0] sm:$0xff]
          %v1781 = vld [vmem:[#allocation2 + $0xf8] sm:$0xff]
          %v1782 = vld [vmem:[#allocation2 + $0x100] sm:$0xff]
          %v1783 = vld [vmem:[#allocation2 + $0x108] sm:$0xff]
          %v1784 = vld [vmem:[#allocation2 + $0x110] sm:$0xff]
          %v1785 = vld [vmem:[#allocation2 + $0x118] sm:$0xff]
          %v1786 = vld [vmem:[#allocation2 + $0x120] sm:$0xff]
          %v1787 = vld [vmem:[#allocation2 + $0x128] sm:$0xff]
          %v1788 = vld [vmem:[#allocation2 + $0x130] sm:$0xff]
          %v1789 = vld [vmem:[#allocation2 + $0x138] sm:$0xff]
          %v1790 = vld [vmem:[#allocation2 + $0x140] sm:$0xff]
          %v1791 = vld [vmem:[#allocation2 + $0x148] sm:$0xff]
          %v1792 = vld [vmem:[#allocation2 + $0x150] sm:$0xff]
          %v1793 = vld [vmem:[#allocation2 + $0x158] sm:$0xff]
          %v1794 = vld [vmem:[#allocation2 + $0x160] sm:$0xff]
          %v1795 = vld [vmem:[#allocation2 + $0x168] sm:$0xff]
          %v1796 = vld [vmem:[#allocation2 + $0x170] sm:$0xff]
          %v1797 = vld [vmem:[#allocation2 + $0x178] sm:$0xff]
          %v1798 = vld [vmem:[#allocation2 + $0x180] sm:$0xff]
          %v1799 = vld [vmem:[#allocation2 + $0x188] sm:$0xff]
          %v1800 = vld [vmem:[#allocation2 + $0x190] sm:$0xff]
          %v1801 = vld [vmem:[#allocation2 + $0x198] sm:$0xff]
          %v1802 = vld [vmem:[#allocation2 + $0x1a0] sm:$0xff]
          %v1803 = vld [vmem:[#allocation2 + $0x1a8] sm:$0xff]
          %v1804 = vld [vmem:[#allocation2 + $0x1b0] sm:$0xff]
          %v1805 = vld [vmem:[#allocation2 + $0x1b8] sm:$0xff]
          %v1806 = vld [vmem:[#allocation2 + $0x1c0] sm:$0xff]
          %v1807 = vld [vmem:[#allocation2 + $0x1c8] sm:$0xff]
          %v1808 = vld [vmem:[#allocation2 + $0x1d0] sm:$0xff]
          %v1809 = vld [vmem:[#allocation2 + $0x1d8] sm:$0xff]
          %v1810 = vld [vmem:[#allocation2 + $0x1e0] sm:$0xff]
          %v1811 = vld [vmem:[#allocation2 + $0x1e8] sm:$0xff]
          %v1812 = vld [vmem:[#allocation2 + $0x1f0] sm:$0xff]
          %v1813 = vld [vmem:[#allocation2 + $0x1f8] sm:$0xff]
          %v1814 = vld [vmem:[#allocation2 + $0x200] sm:$0xff]
          %v1815 = vld [vmem:[#allocation2 + $0x208] sm:$0xff]
          %v1816 = vld [vmem:[#allocation2 + $0x210] sm:$0xff]
          %v1817 = vld [vmem:[#allocation2 + $0x218] sm:$0xff]
          %v1818 = vld [vmem:[#allocation2 + $0x220] sm:$0xff]
          %v1819 = vld [vmem:[#allocation2 + $0x228] sm:$0xff]
          %v1820 = vld [vmem:[#allocation2 + $0x230] sm:$0xff]
          %v1821 = vld [vmem:[#allocation2 + $0x238] sm:$0xff]
          %v1822 = vld [vmem:[#allocation2 + $0x240] sm:$0xff]
          %v1823 = vld [vmem:[#allocation2 + $0x248] sm:$0xff]
          %v1824 = vld [vmem:[#allocation2 + $0x250] sm:$0xff]
          %v1825 = vld [vmem:[#allocation2 + $0x258] sm:$0xff]
          %v1826 = vld [vmem:[#allocation2 + $0x260] sm:$0xff]
          %v1827 = vld [vmem:[#allocation2 + $0x268] sm:$0xff]
          %v1828 = vld [vmem:[#allocation2 + $0x270] sm:$0xff]
          %v1829 = vld [vmem:[#allocation2 + $0x278] sm:$0xff]
          %v1830 = vld [vmem:[#allocation2 + $0x280] sm:$0xff]
          %v1831 = vld [vmem:[#allocation2 + $0x288] sm:$0xff]
          %v1832 = vld [vmem:[#allocation2 + $0x290] sm:$0xff]
          %v1833 = vld [vmem:[#allocation2 + $0x298] sm:$0xff]
          %v1834 = vld [vmem:[#allocation2 + $0x2a0] sm:$0xff]
          %v1835 = vld [vmem:[#allocation2 + $0x2a8] sm:$0xff]
          %v1836 = vld [vmem:[#allocation2 + $0x2b0] sm:$0xff]
          %v1837 = vld [vmem:[#allocation2 + $0x2b8] sm:$0xff]
          %v1838 = vld [vmem:[#allocation2 + $0x2c0] sm:$0xff]
          %v1839 = vld [vmem:[#allocation2 + $0x2c8] sm:$0xff]
          %v1840 = vld [vmem:[#allocation2 + $0x2d0] sm:$0xff]
          %v1841 = vld [vmem:[#allocation2 + $0x2d8] sm:$0xff]
          %v1842 = vld [vmem:[#allocation2 + $0x2e0] sm:$0xff]
          %v1843 = vld [vmem:[#allocation2 + $0x2e8] sm:$0xff]
          %v1844 = vld [vmem:[#allocation2 + $0x2f0] sm:$0xff]
          %v1845 = vld [vmem:[#allocation2 + $0x2f8] sm:$0xff]
          %v1846 = vld [vmem:[#allocation2 + $0x300] sm:$0xff]
          %v1847 = vld [vmem:[#allocation2 + $0x308] sm:$0xff]
          %v1848 = vld [vmem:[#allocation2 + $0x310] sm:$0xff]
          %v1849 = vld [vmem:[#allocation2 + $0x318] sm:$0xff]
          %v1850 = vld [vmem:[#allocation2 + $0x320] sm:$0xff]
          %v1851 = vld [vmem:[#allocation2 + $0x328] sm:$0xff]
          %v1852 = vld [vmem:[#allocation2 + $0x330] sm:$0xff]
          %v1853 = vld [vmem:[#allocation2 + $0x338] sm:$0xff]
          %v1854 = vld [vmem:[#allocation2 + $0x340] sm:$0xff]
          %v1855 = vld [vmem:[#allocation2 + $0x348] sm:$0xff]
          %v1856 = vld [vmem:[#allocation2 + $0x350] sm:$0xff]
          %v1857 = vld [vmem:[#allocation2 + $0x358] sm:$0xff]
          %v1858 = vld [vmem:[#allocation2 + $0x360] sm:$0xff]
          %v1859 = vld [vmem:[#allocation2 + $0x368] sm:$0xff]
          %v1860 = vld [vmem:[#allocation2 + $0x370] sm:$0xff]
          %v1861 = vld [vmem:[#allocation2 + $0x378] sm:$0xff]
          %v1862 = vld [vmem:[#allocation2 + $0x380] sm:$0xff]
          %v1863 = vld [vmem:[#allocation2 + $0x388] sm:$0xff]
          %v1864 = vld [vmem:[#allocation2 + $0x390] sm:$0xff]
          %v1865 = vld [vmem:[#allocation2 + $0x398] sm:$0xff]
          %v1866 = vld [vmem:[#allocation2 + $0x3a0] sm:$0xff]
          %v1867 = vld [vmem:[#allocation2 + $0x3a8] sm:$0xff]
          %v1868 = vld [vmem:[#allocation2 + $0x3b0] sm:$0xff]
          %v1869 = vld [vmem:[#allocation2 + $0x3b8] sm:$0xff]
          %v1870 = vld [vmem:[#allocation2 + $0x3c0] sm:$0xff]
          %v1871 = vld [vmem:[#allocation2 + $0x3c8] sm:$0xff]
          %v1872 = vld [vmem:[#allocation2 + $0x3d0] sm:$0xff]
          %v1873 = vld [vmem:[#allocation2 + $0x3d8] sm:$0xff]
          %v1874 = vld [vmem:[#allocation2 + $0x3e0] sm:$0xff]
          %v1875 = vld [vmem:[#allocation2 + $0x3e8] sm:$0xff]
          %v1876 = vld [vmem:[#allocation2 + $0x3f0] sm:$0xff]
          %v1877 = vld [vmem:[#allocation2 + $0x3f8] sm:$0xff]
          %v1878 = vld [vmem:[%s262] sm:$0x3]
          %v1880 = vlaneseq
          %v1881 = vshrl.u32 %v1880, 7
          %v1882 = vsub.s32 0, %v1881
          %v1883 = vrot.slane %v1878, %v1882
          %v1884 = vlaneseq
          %v1885 = vshrl.u32 %v1884, 7
          %v1886 = vsub.s32 1, %v1885
          %v1887 = vrot.slane %v1878, %v1886
          %v1890 = vadd.f32 %v1750, %v1883
          %v1891 = vadd.f32 %v1751, %v1887
          %v1892 = vadd.f32 %v1752, %v1883
          %v1893 = vadd.f32 %v1753, %v1887
          %v1894 = vadd.f32 %v1754, %v1883
          %v1895 = vadd.f32 %v1755, %v1887
          %v1896 = vadd.f32 %v1756, %v1883
          %v1897 = vadd.f32 %v1757, %v1887
          %v1898 = vadd.f32 %v1758, %v1883
          %v1899 = vadd.f32 %v1759, %v1887
          %v1900 = vadd.f32 %v1760, %v1883
          %v1901 = vadd.f32 %v1761, %v1887
          %v1902 = vadd.f32 %v1762, %v1883
          %v1903 = vadd.f32 %v1763, %v1887
          %v1904 = vadd.f32 %v1764, %v1883
          %v1905 = vadd.f32 %v1765, %v1887
          %v1906 = vadd.f32 %v1766, %v1883
          %v1907 = vadd.f32 %v1767, %v1887
          %v1908 = vadd.f32 %v1768, %v1883
          %v1909 = vadd.f32 %v1769, %v1887
          %v1910 = vadd.f32 %v1770, %v1883
          %v1911 = vadd.f32 %v1771, %v1887
          %v1912 = vadd.f32 %v1772, %v1883
          %v1913 = vadd.f32 %v1773, %v1887
          %v1914 = vadd.f32 %v1774, %v1883
          %v1915 = vadd.f32 %v1775, %v1887
          %v1916 = vadd.f32 %v1776, %v1883
          %v1917 = vadd.f32 %v1777, %v1887
          %v1918 = vadd.f32 %v1778, %v1883
          %v1919 = vadd.f32 %v1779, %v1887
          %v1920 = vadd.f32 %v1780, %v1883
          %v1921 = vadd.f32 %v1781, %v1887
          %v1922 = vadd.f32 %v1782, %v1883
          %v1923 = vadd.f32 %v1783, %v1887
          %v1924 = vadd.f32 %v1784, %v1883
          %v1925 = vadd.f32 %v1785, %v1887
          %v1926 = vadd.f32 %v1786, %v1883
          %v1927 = vadd.f32 %v1787, %v1887
          %v1928 = vadd.f32 %v1788, %v1883
          %v1929 = vadd.f32 %v1789, %v1887
          %v1930 = vadd.f32 %v1790, %v1883
          %v1931 = vadd.f32 %v1791, %v1887
          %v1932 = vadd.f32 %v1792, %v1883
          %v1933 = vadd.f32 %v1793, %v1887
          %v1934 = vadd.f32 %v1794, %v1883
          %v1935 = vadd.f32 %v1795, %v1887
          %v1936 = vadd.f32 %v1796, %v1883
          %v1937 = vadd.f32 %v1797, %v1887
          %v1938 = vadd.f32 %v1798, %v1883
          %v1939 = vadd.f32 %v1799, %v1887
          %v1940 = vadd.f32 %v1800, %v1883
          %v1941 = vadd.f32 %v1801, %v1887
          %v1942 = vadd.f32 %v1802, %v1883
          %v1943 = vadd.f32 %v1803, %v1887
          %v1944 = vadd.f32 %v1804, %v1883
          %v1945 = vadd.f32 %v1805, %v1887
          %v1946 = vadd.f32 %v1806, %v1883
          %v1947 = vadd.f32 %v1807, %v1887
          %v1948 = vadd.f32 %v1808, %v1883
          %v1949 = vadd.f32 %v1809, %v1887
          %v1950 = vadd.f32 %v1810, %v1883
          %v1951 = vadd.f32 %v1811, %v1887
          %v1952 = vadd.f32 %v1812, %v1883
          %v1953 = vadd.f32 %v1813, %v1887
          %v1954 = vadd.f32 %v1814, %v1883
          %v1955 = vadd.f32 %v1815, %v1887
          %v1956 = vadd.f32 %v1816, %v1883
          %v1957 = vadd.f32 %v1817, %v1887
          %v1958 = vadd.f32 %v1818, %v1883
          %v1959 = vadd.f32 %v1819, %v1887
          %v1960 = vadd.f32 %v1820, %v1883
          %v1961 = vadd.f32 %v1821, %v1887
          %v1962 = vadd.f32 %v1822, %v1883
          %v1963 = vadd.f32 %v1823, %v1887
          %v1964 = vadd.f32 %v1824, %v1883
          %v1965 = vadd.f32 %v1825, %v1887
          %v1966 = vadd.f32 %v1826, %v1883
          %v1967 = vadd.f32 %v1827, %v1887
          %v1968 = vadd.f32 %v1828, %v1883
          %v1969 = vadd.f32 %v1829, %v1887
          %v1970 = vadd.f32 %v1830, %v1883
          %v1971 = vadd.f32 %v1831, %v1887
          %v1972 = vadd.f32 %v1832, %v1883
          %v1973 = vadd.f32 %v1833, %v1887
          %v1974 = vadd.f32 %v1834, %v1883
          %v1975 = vadd.f32 %v1835, %v1887
          %v1976 = vadd.f32 %v1836, %v1883
          %v1977 = vadd.f32 %v1837, %v1887
          %v1978 = vadd.f32 %v1838, %v1883
          %v1979 = vadd.f32 %v1839, %v1887
          %v1980 = vadd.f32 %v1840, %v1883
          %v1981 = vadd.f32 %v1841, %v1887
          %v1982 = vadd.f32 %v1842, %v1883
          %v1983 = vadd.f32 %v1843, %v1887
          %v1984 = vadd.f32 %v1844, %v1883
          %v1985 = vadd.f32 %v1845, %v1887
          %v1986 = vadd.f32 %v1846, %v1883
          %v1987 = vadd.f32 %v1847, %v1887
          %v1988 = vadd.f32 %v1848, %v1883
          %v1989 = vadd.f32 %v1849, %v1887
          %v1990 = vadd.f32 %v1850, %v1883
          %v1991 = vadd.f32 %v1851, %v1887
          %v1992 = vadd.f32 %v1852, %v1883
          %v1993 = vadd.f32 %v1853, %v1887
          %v1994 = vadd.f32 %v1854, %v1883
          %v1995 = vadd.f32 %v1855, %v1887
          %v1996 = vadd.f32 %v1856, %v1883
          %v1997 = vadd.f32 %v1857, %v1887
          %v1998 = vadd.f32 %v1858, %v1883
          %v1999 = vadd.f32 %v1859, %v1887
          %v2000 = vadd.f32 %v1860, %v1883
          %v2001 = vadd.f32 %v1861, %v1887
          %v2002 = vadd.f32 %v1862, %v1883
          %v2003 = vadd.f32 %v1863, %v1887
          %v2004 = vadd.f32 %v1864, %v1883
          %v2005 = vadd.f32 %v1865, %v1887
          %v2006 = vadd.f32 %v1866, %v1883
          %v2007 = vadd.f32 %v1867, %v1887
          %v2008 = vadd.f32 %v1868, %v1883
          %v2009 = vadd.f32 %v1869, %v1887
          %v2010 = vadd.f32 %v1870, %v1883
          %v2011 = vadd.f32 %v1871, %v1887
          %v2012 = vadd.f32 %v1872, %v1883
          %v2013 = vadd.f32 %v1873, %v1887
          %v2014 = vadd.f32 %v1874, %v1883
          %v2015 = vadd.f32 %v1875, %v1887
          %v2016 = vadd.f32 %v1876, %v1883
          %v2017 = vadd.f32 %v1877, %v1887
          %v2018 = vpack.c.bf16 %v1892, %v1890
          %v2019 = vpack.c.bf16 %v1893, %v1891
          %v2020 = vpack.c.bf16 %v1896, %v1894
          %v2021 = vpack.c.bf16 %v1897, %v1895
          %v2022 = vpack.c.bf16 %v1900, %v1898
          %v2023 = vpack.c.bf16 %v1901, %v1899
          %v2024 = vpack.c.bf16 %v1904, %v1902
          %v2025 = vpack.c.bf16 %v1905, %v1903
          %v2026 = vpack.c.bf16 %v1908, %v1906
          %v2027 = vpack.c.bf16 %v1909, %v1907
          %v2028 = vpack.c.bf16 %v1912, %v1910
          %v2029 = vpack.c.bf16 %v1913, %v1911
          %v2030 = vpack.c.bf16 %v1916, %v1914
          %v2031 = vpack.c.bf16 %v1917, %v1915
          %v2032 = vpack.c.bf16 %v1920, %v1918
          %v2033 = vpack.c.bf16 %v1921, %v1919
          %v2034 = vpack.c.bf16 %v1924, %v1922
          %v2035 = vpack.c.bf16 %v1925, %v1923
          %v2036 = vpack.c.bf16 %v1928, %v1926
          %v2037 = vpack.c.bf16 %v1929, %v1927
          %v2038 = vpack.c.bf16 %v1932, %v1930
          %v2039 = vpack.c.bf16 %v1933, %v1931
          %v2040 = vpack.c.bf16 %v1936, %v1934
          %v2041 = vpack.c.bf16 %v1937, %v1935
          %v2042 = vpack.c.bf16 %v1940, %v1938
          %v2043 = vpack.c.bf16 %v1941, %v1939
          %v2044 = vpack.c.bf16 %v1944, %v1942
          %v2045 = vpack.c.bf16 %v1945, %v1943
          %v2046 = vpack.c.bf16 %v1948, %v1946
          %v2047 = vpack.c.bf16 %v1949, %v1947
          %v2048 = vpack.c.bf16 %v1952, %v1950
          %v2049 = vpack.c.bf16 %v1953, %v1951
          %v2050 = vpack.c.bf16 %v1956, %v1954
          %v2051 = vpack.c.bf16 %v1957, %v1955
          %v2052 = vpack.c.bf16 %v1960, %v1958
          %v2053 = vpack.c.bf16 %v1961, %v1959
          %v2054 = vpack.c.bf16 %v1964, %v1962
          %v2055 = vpack.c.bf16 %v1965, %v1963
          %v2056 = vpack.c.bf16 %v1968, %v1966
          %v2057 = vpack.c.bf16 %v1969, %v1967
          %v2058 = vpack.c.bf16 %v1972, %v1970
          %v2059 = vpack.c.bf16 %v1973, %v1971
          %v2060 = vpack.c.bf16 %v1976, %v1974
          %v2061 = vpack.c.bf16 %v1977, %v1975
          %v2062 = vpack.c.bf16 %v1980, %v1978
          %v2063 = vpack.c.bf16 %v1981, %v1979
          %v2064 = vpack.c.bf16 %v1984, %v1982
          %v2065 = vpack.c.bf16 %v1985, %v1983
          %v2066 = vpack.c.bf16 %v1988, %v1986
          %v2067 = vpack.c.bf16 %v1989, %v1987
          %v2068 = vpack.c.bf16 %v1992, %v1990
          %v2069 = vpack.c.bf16 %v1993, %v1991
          %v2070 = vpack.c.bf16 %v1996, %v1994
          %v2071 = vpack.c.bf16 %v1997, %v1995
          %v2072 = vpack.c.bf16 %v2000, %v1998
          %v2073 = vpack.c.bf16 %v2001, %v1999
          %v2074 = vpack.c.bf16 %v2004, %v2002
          %v2075 = vpack.c.bf16 %v2005, %v2003
          %v2076 = vpack.c.bf16 %v2008, %v2006
          %v2077 = vpack.c.bf16 %v2009, %v2007
          %v2078 = vpack.c.bf16 %v2012, %v2010
          %v2079 = vpack.c.bf16 %v2013, %v2011
          %v2080 = vpack.c.bf16 %v2016, %v2014
          %v2081 = vpack.c.bf16 %v2017, %v2015
          %v2146 = vunpack.c.l.b16 %v2018
          %v2147 = vunpack.c.l.b16 %v2019
          %v2148 = vunpack.c.h.b16 %v2018
          %v2149 = vunpack.c.h.b16 %v2019
          %v2150 = vunpack.c.l.b16 %v2020
          %v2151 = vunpack.c.l.b16 %v2021
          %v2152 = vunpack.c.h.b16 %v2020
          %v2153 = vunpack.c.h.b16 %v2021
          %v2154 = vunpack.c.l.b16 %v2022
          %v2155 = vunpack.c.l.b16 %v2023
          %v2156 = vunpack.c.h.b16 %v2022
          %v2157 = vunpack.c.h.b16 %v2023
          %v2158 = vunpack.c.l.b16 %v2024
          %v2159 = vunpack.c.l.b16 %v2025
          %v2160 = vunpack.c.h.b16 %v2024
          %v2161 = vunpack.c.h.b16 %v2025
          %v2162 = vunpack.c.l.b16 %v2026
          %v2163 = vunpack.c.l.b16 %v2027
          %v2164 = vunpack.c.h.b16 %v2026
          %v2165 = vunpack.c.h.b16 %v2027
          %v2166 = vunpack.c.l.b16 %v2028
          %v2167 = vunpack.c.l.b16 %v2029
          %v2168 = vunpack.c.h.b16 %v2028
          %v2169 = vunpack.c.h.b16 %v2029
          %v2170 = vunpack.c.l.b16 %v2030
          %v2171 = vunpack.c.l.b16 %v2031
          %v2172 = vunpack.c.h.b16 %v2030
          %v2173 = vunpack.c.h.b16 %v2031
          %v2174 = vunpack.c.l.b16 %v2032
          %v2175 = vunpack.c.l.b16 %v2033
          %v2176 = vunpack.c.h.b16 %v2032
          %v2177 = vunpack.c.h.b16 %v2033
          %v2178 = vunpack.c.l.b16 %v2034
          %v2179 = vunpack.c.l.b16 %v2035
          %v2180 = vunpack.c.h.b16 %v2034
          %v2181 = vunpack.c.h.b16 %v2035
          %v2182 = vunpack.c.l.b16 %v2036
          %v2183 = vunpack.c.l.b16 %v2037
          %v2184 = vunpack.c.h.b16 %v2036
          %v2185 = vunpack.c.h.b16 %v2037
          %v2186 = vunpack.c.l.b16 %v2038
          %v2187 = vunpack.c.l.b16 %v2039
          %v2188 = vunpack.c.h.b16 %v2038
          %v2189 = vunpack.c.h.b16 %v2039
          %v2190 = vunpack.c.l.b16 %v2040
          %v2191 = vunpack.c.l.b16 %v2041
          %v2192 = vunpack.c.h.b16 %v2040
          %v2193 = vunpack.c.h.b16 %v2041
          %v2194 = vunpack.c.l.b16 %v2042
          %v2195 = vunpack.c.l.b16 %v2043
          %v2196 = vunpack.c.h.b16 %v2042
          %v2197 = vunpack.c.h.b16 %v2043
          %v2198 = vunpack.c.l.b16 %v2044
          %v2199 = vunpack.c.l.b16 %v2045
          %v2200 = vunpack.c.h.b16 %v2044
          %v2201 = vunpack.c.h.b16 %v2045
          %v2202 = vunpack.c.l.b16 %v2046
          %v2203 = vunpack.c.l.b16 %v2047
          %v2204 = vunpack.c.h.b16 %v2046
          %v2205 = vunpack.c.h.b16 %v2047
          %v2206 = vunpack.c.l.b16 %v2048
          %v2207 = vunpack.c.l.b16 %v2049
          %v2208 = vunpack.c.h.b16 %v2048
          %v2209 = vunpack.c.h.b16 %v2049
          %v2210 = vunpack.c.l.b16 %v2050
          %v2211 = vunpack.c.l.b16 %v2051
          %v2212 = vunpack.c.h.b16 %v2050
          %v2213 = vunpack.c.h.b16 %v2051
          %v2214 = vunpack.c.l.b16 %v2052
          %v2215 = vunpack.c.l.b16 %v2053
          %v2216 = vunpack.c.h.b16 %v2052
          %v2217 = vunpack.c.h.b16 %v2053
          %v2218 = vunpack.c.l.b16 %v2054
          %v2219 = vunpack.c.l.b16 %v2055
          %v2220 = vunpack.c.h.b16 %v2054
          %v2221 = vunpack.c.h.b16 %v2055
          %v2222 = vunpack.c.l.b16 %v2056
          %v2223 = vunpack.c.l.b16 %v2057
          %v2224 = vunpack.c.h.b16 %v2056
          %v2225 = vunpack.c.h.b16 %v2057
          %v2226 = vunpack.c.l.b16 %v2058
          %v2227 = vunpack.c.l.b16 %v2059
          %v2228 = vunpack.c.h.b16 %v2058
          %v2229 = vunpack.c.h.b16 %v2059
          %v2230 = vunpack.c.l.b16 %v2060
          %v2231 = vunpack.c.l.b16 %v2061
          %v2232 = vunpack.c.h.b16 %v2060
          %v2233 = vunpack.c.h.b16 %v2061
          %v2234 = vunpack.c.l.b16 %v2062
          %v2235 = vunpack.c.l.b16 %v2063
          %v2236 = vunpack.c.h.b16 %v2062
          %v2237 = vunpack.c.h.b16 %v2063
          %v2238 = vunpack.c.l.b16 %v2064
          %v2239 = vunpack.c.l.b16 %v2065
          %v2240 = vunpack.c.h.b16 %v2064
          %v2241 = vunpack.c.h.b16 %v2065
          %v2242 = vunpack.c.l.b16 %v2066
          %v2243 = vunpack.c.l.b16 %v2067
          %v2244 = vunpack.c.h.b16 %v2066
          %v2245 = vunpack.c.h.b16 %v2067
          %v2246 = vunpack.c.l.b16 %v2068
          %v2247 = vunpack.c.l.b16 %v2069
          %v2248 = vunpack.c.h.b16 %v2068
          %v2249 = vunpack.c.h.b16 %v2069
          %v2250 = vunpack.c.l.b16 %v2070
          %v2251 = vunpack.c.l.b16 %v2071
          %v2252 = vunpack.c.h.b16 %v2070
          %v2253 = vunpack.c.h.b16 %v2071
          %v2254 = vunpack.c.l.b16 %v2072
          %v2255 = vunpack.c.l.b16 %v2073
          %v2256 = vunpack.c.h.b16 %v2072
          %v2257 = vunpack.c.h.b16 %v2073
          %v2258 = vunpack.c.l.b16 %v2074
          %v2259 = vunpack.c.l.b16 %v2075
          %v2260 = vunpack.c.h.b16 %v2074
          %v2261 = vunpack.c.h.b16 %v2075
          %v2262 = vunpack.c.l.b16 %v2076
          %v2263 = vunpack.c.l.b16 %v2077
          %v2264 = vunpack.c.h.b16 %v2076
          %v2265 = vunpack.c.h.b16 %v2077
          %v2266 = vunpack.c.l.b16 %v2078
          %v2267 = vunpack.c.l.b16 %v2079
          %v2268 = vunpack.c.h.b16 %v2078
          %v2269 = vunpack.c.h.b16 %v2079
          %v2270 = vunpack.c.l.b16 %v2080
          %v2271 = vunpack.c.l.b16 %v2081
          %v2272 = vunpack.c.h.b16 %v2080
          %v2273 = vunpack.c.h.b16 %v2081
          %v2274 = vpack.c.b16 %v2147, %v2146
          %v2275 = vpack.c.b16 %v2149, %v2148
          %v2276 = vpack.c.b16 %v2151, %v2150
          %v2277 = vpack.c.b16 %v2153, %v2152
          %v2278 = vpack.c.b16 %v2155, %v2154
          %v2279 = vpack.c.b16 %v2157, %v2156
          %v2280 = vpack.c.b16 %v2159, %v2158
          %v2281 = vpack.c.b16 %v2161, %v2160
          %v2282 = vpack.c.b16 %v2163, %v2162
          %v2283 = vpack.c.b16 %v2165, %v2164
          %v2284 = vpack.c.b16 %v2167, %v2166
          %v2285 = vpack.c.b16 %v2169, %v2168
          %v2286 = vpack.c.b16 %v2171, %v2170
          %v2287 = vpack.c.b16 %v2173, %v2172
          %v2288 = vpack.c.b16 %v2175, %v2174
          %v2289 = vpack.c.b16 %v2177, %v2176
          %v2290 = vpack.c.b16 %v2179, %v2178
          %v2291 = vpack.c.b16 %v2181, %v2180
          %v2292 = vpack.c.b16 %v2183, %v2182
          %v2293 = vpack.c.b16 %v2185, %v2184
          %v2294 = vpack.c.b16 %v2187, %v2186
          %v2295 = vpack.c.b16 %v2189, %v2188
          %v2296 = vpack.c.b16 %v2191, %v2190
          %v2297 = vpack.c.b16 %v2193, %v2192
          %v2298 = vpack.c.b16 %v2195, %v2194
          %v2299 = vpack.c.b16 %v2197, %v2196
          %v2300 = vpack.c.b16 %v2199, %v2198
          %v2301 = vpack.c.b16 %v2201, %v2200
          %v2302 = vpack.c.b16 %v2203, %v2202
          %v2303 = vpack.c.b16 %v2205, %v2204
          %v2304 = vpack.c.b16 %v2207, %v2206
          %v2305 = vpack.c.b16 %v2209, %v2208
          %v2306 = vpack.c.b16 %v2211, %v2210
          %v2307 = vpack.c.b16 %v2213, %v2212
          %v2308 = vpack.c.b16 %v2215, %v2214
          %v2309 = vpack.c.b16 %v2217, %v2216
          %v2310 = vpack.c.b16 %v2219, %v2218
          %v2311 = vpack.c.b16 %v2221, %v2220
          %v2312 = vpack.c.b16 %v2223, %v2222
          %v2313 = vpack.c.b16 %v2225, %v2224
          %v2314 = vpack.c.b16 %v2227, %v2226
          %v2315 = vpack.c.b16 %v2229, %v2228
          %v2316 = vpack.c.b16 %v2231, %v2230
          %v2317 = vpack.c.b16 %v2233, %v2232
          %v2318 = vpack.c.b16 %v2235, %v2234
          %v2319 = vpack.c.b16 %v2237, %v2236
          %v2320 = vpack.c.b16 %v2239, %v2238
          %v2321 = vpack.c.b16 %v2241, %v2240
          %v2322 = vpack.c.b16 %v2243, %v2242
          %v2323 = vpack.c.b16 %v2245, %v2244
          %v2324 = vpack.c.b16 %v2247, %v2246
          %v2325 = vpack.c.b16 %v2249, %v2248
          %v2326 = vpack.c.b16 %v2251, %v2250
          %v2327 = vpack.c.b16 %v2253, %v2252
          %v2328 = vpack.c.b16 %v2255, %v2254
          %v2329 = vpack.c.b16 %v2257, %v2256
          %v2330 = vpack.c.b16 %v2259, %v2258
          %v2331 = vpack.c.b16 %v2261, %v2260
          %v2332 = vpack.c.b16 %v2263, %v2262
          %v2333 = vpack.c.b16 %v2265, %v2264
          %v2334 = vpack.c.b16 %v2267, %v2266
          %v2335 = vpack.c.b16 %v2269, %v2268
          %v2336 = vpack.c.b16 %v2271, %v2270
          %v2337 = vpack.c.b16 %v2273, %v2272
          %2402 = vst [vmem:[%s294] sm:$0xff] %v2274
          %2403 = vst [vmem:[%s294 + $0x8] sm:$0xff] %v2275
          %2404 = vst [vmem:[%s294 + $0x10] sm:$0xff] %v2276
          %2405 = vst [vmem:[%s294 + $0x18] sm:$0xff] %v2277
          %2406 = vst [vmem:[%s294 + $0x20] sm:$0xff] %v2278
          %2407 = vst [vmem:[%s294 + $0x28] sm:$0xff] %v2279
          %2408 = vst [vmem:[%s294 + $0x30] sm:$0xff] %v2280
          %2409 = vst [vmem:[%s294 + $0x38] sm:$0xff] %v2281
          %2410 = vst [vmem:[%s294 + $0x40] sm:$0xff] %v2282
          %2411 = vst [vmem:[%s294 + $0x48] sm:$0xff] %v2283
          %2412 = vst [vmem:[%s294 + $0x50] sm:$0xff] %v2284
          %2413 = vst [vmem:[%s294 + $0x58] sm:$0xff] %v2285
          %2414 = vst [vmem:[%s294 + $0x60] sm:$0xff] %v2286
          %2415 = vst [vmem:[%s294 + $0x68] sm:$0xff] %v2287
          %2416 = vst [vmem:[%s294 + $0x70] sm:$0xff] %v2288
          %2417 = vst [vmem:[%s294 + $0x78] sm:$0xff] %v2289
          %2418 = vst [vmem:[%s294 + $0x80] sm:$0xff] %v2290
          %2419 = vst [vmem:[%s294 + $0x88] sm:$0xff] %v2291
          %2420 = vst [vmem:[%s294 + $0x90] sm:$0xff] %v2292
          %2421 = vst [vmem:[%s294 + $0x98] sm:$0xff] %v2293
          %2422 = vst [vmem:[%s294 + $0xa0] sm:$0xff] %v2294
          %2423 = vst [vmem:[%s294 + $0xa8] sm:$0xff] %v2295
          %2424 = vst [vmem:[%s294 + $0xb0] sm:$0xff] %v2296
          %2425 = vst [vmem:[%s294 + $0xb8] sm:$0xff] %v2297
          %2426 = vst [vmem:[%s294 + $0xc0] sm:$0xff] %v2298
          %2427 = vst [vmem:[%s294 + $0xc8] sm:$0xff] %v2299
          %2428 = vst [vmem:[%s294 + $0xd0] sm:$0xff] %v2300
          %2429 = vst [vmem:[%s294 + $0xd8] sm:$0xff] %v2301
          %2430 = vst [vmem:[%s294 + $0xe0] sm:$0xff] %v2302
          %2431 = vst [vmem:[%s294 + $0xe8] sm:$0xff] %v2303
          %2432 = vst [vmem:[%s294 + $0xf0] sm:$0xff] %v2304
          %2433 = vst [vmem:[%s294 + $0xf8] sm:$0xff] %v2305
          %2434 = vst [vmem:[%s294 + $0x100] sm:$0xff] %v2306
          %2435 = vst [vmem:[%s294 + $0x108] sm:$0xff] %v2307
          %2436 = vst [vmem:[%s294 + $0x110] sm:$0xff] %v2308
          %2437 = vst [vmem:[%s294 + $0x118] sm:$0xff] %v2309
          %2438 = vst [vmem:[%s294 + $0x120] sm:$0xff] %v2310
          %2439 = vst [vmem:[%s294 + $0x128] sm:$0xff] %v2311
          %2440 = vst [vmem:[%s294 + $0x130] sm:$0xff] %v2312
          %2441 = vst [vmem:[%s294 + $0x138] sm:$0xff] %v2313
          %2442 = vst [vmem:[%s294 + $0x140] sm:$0xff] %v2314
          %2443 = vst [vmem:[%s294 + $0x148] sm:$0xff] %v2315
          %2444 = vst [vmem:[%s294 + $0x150] sm:$0xff] %v2316
          %2445 = vst [vmem:[%s294 + $0x158] sm:$0xff] %v2317
          %2446 = vst [vmem:[%s294 + $0x160] sm:$0xff] %v2318
          %2447 = vst [vmem:[%s294 + $0x168] sm:$0xff] %v2319
          %2448 = vst [vmem:[%s294 + $0x170] sm:$0xff] %v2320
          %2449 = vst [vmem:[%s294 + $0x178] sm:$0xff] %v2321
          %2450 = vst [vmem:[%s294 + $0x180] sm:$0xff] %v2322
          %2451 = vst [vmem:[%s294 + $0x188] sm:$0xff] %v2323
          %2452 = vst [vmem:[%s294 + $0x190] sm:$0xff] %v2324
          %2453 = vst [vmem:[%s294 + $0x198] sm:$0xff] %v2325
          %2454 = vst [vmem:[%s294 + $0x1a0] sm:$0xff] %v2326
          %2455 = vst [vmem:[%s294 + $0x1a8] sm:$0xff] %v2327
          %2456 = vst [vmem:[%s294 + $0x1b0] sm:$0xff] %v2328
          %2457 = vst [vmem:[%s294 + $0x1b8] sm:$0xff] %v2329
          %2458 = vst [vmem:[%s294 + $0x1c0] sm:$0xff] %v2330
          %2459 = vst [vmem:[%s294 + $0x1c8] sm:$0xff] %v2331
          %2460 = vst [vmem:[%s294 + $0x1d0] sm:$0xff] %v2332
          %2461 = vst [vmem:[%s294 + $0x1d8] sm:$0xff] %v2333
          %2462 = vst [vmem:[%s294 + $0x1e0] sm:$0xff] %v2334
          %2463 = vst [vmem:[%s294 + $0x1e8] sm:$0xff] %v2335
          %2464 = vst [vmem:[%s294 + $0x1f0] sm:$0xff] %v2336
          %2465 = vst [vmem:[%s294 + $0x1f8] sm:$0xff] %v2337
        $region52: #{tpu_custom_call.1} parent=31 // pred_fallthru
          _
        %s2466 = sand.u32 %s134, 1
        %s2467 = scalar_lea.sflag [#allocation5], %s2466
        %s2468 = sand.u32 %s134, 1
        %s2469 = smul.addr %s2468, 512
        %s2470 = scalar_lea.vmem [#allocation9], %s2469
        // Predicated region
        $region53: #{tpu_custom_call.1} parent=31 // pred_check
          %p2471 = pneg %p144
        $region54: #{tpu_custom_call.1} parent=31 // pred_check_branch
          %2473 = sbr.rel (%p2471) target = $region56
        $region55: #{tpu_custom_call.1} parent=31 // pred_region
          %s2474 = smul.u32 64, %s28
          %s2475 = smul.u32 2, %s29
          %s2477 = ssub.s32 8192, 8192
          %2478 = vsyncadd %s2467, %s2477
          %s2479 = smul.addr %s2474, 6
          %s2480 = sadd.s32 %s2475, %s2479
          %s2481 = smul.addr %s2480, 64
          %s2482 = scalar_lea.hbm %s3, %s2481
          %s2483 = sshll.u32 %s2470, 4
          %s2484 = int_to_ptr.vmem [resolvable:$true] %s2483
          %2489 = dma.vmem_to_hbm [thread:$0]  %s2484, 8192, %s2482, %s2467, 128, 384, 8
        $region56: #{tpu_custom_call.1} parent=31 // pred_fallthru
          _
      $region32: #{tpu_custom_call.1} parent=5 // pred_fallthru
        _
      %p2490 = scmp.le.s32.totalorder 2, %s18
      // Predicated region
      $region57: #{tpu_custom_call.1} parent=5 // pred_check
        %p2491 = pneg %p2490
      $region58: #{tpu_custom_call.1} parent=5 // pred_check_branch
        %2493 = sbr.rel (%p2491) target = $region60
      $region59: #{tpu_custom_call.1} parent=5 // pred_region
        %s2494 = ssub.s32 %s18, 2
        // Predicated region
        $region61: #{tpu_custom_call.1} parent=59 // pred_check
          %p2495 = pneg %p150
        $region62: #{tpu_custom_call.1} parent=59 // pred_check_branch
          %2497 = sbr.rel (%p2495) target = $region64
        $region63: #{tpu_custom_call.1} parent=59 // pred_region
          %s2498 = sand.u32 %s135, 1
          %s2499 = scalar_lea.sflag [#allocation5], %s2498
          %s2500 = sand.u32 %s135, 1
          %s2501 = smul.addr %s2500, 512
          %s2502 = scalar_lea.vmem [#allocation9], %s2501
          %2503 = dma.done %s2499, 8192
        $region64: #{tpu_custom_call.1} parent=59 // pred_fallthru
          _
      $region60: #{tpu_custom_call.1} parent=5 // pred_fallthru
        _
    $region6: #{tpu_custom_call.1} parent=1 // loop_footer
      %s22 = sadd.s32 1, %s18
    $region7: #{tpu_custom_call.1} parent=1 // loop_footer_branch
      %17 = sbr.rel target = $region3
    $region8: #{tpu_custom_call.1} parent=1 // loop_exit
      _
    %2504 = vsyncpa [#allocation4], 1
    %s2505 = scalar_lea.sflag [#allocation4], 1
    %2506 = vsyncpa %s2505, 1
    %2507 = vsyncpa [#allocation7], 1
    %s2508 = scalar_lea.sflag [#allocation7], 1
    %2509 = vsyncpa %s2508, 1
    %2510 = vsyncpa [#allocation5], 1
    %s2511 = scalar_lea.sflag [#allocation5], 1
    %2512 = vsyncpa %s2511, 1

</llo_original>
